<compile_context>
chip_gen: v6e
topology: v6e:2x2x1
jax: 0.10.0
libtpu: 0.0.40
codegen_flags: <defaults>
</compile_context>

<pallas_src>
import functools
import math

import jax
import jax.numpy as jnp
from jax import lax
from jax.experimental import pallas as pl
from jax.experimental.pallas import tpu as pltpu


def _mha_flash_kernel(q_ref, k_ref, v_ref,
                      wq_ref, bq_ref, wk_ref, bk_ref, wv_ref, bv_ref,
                      wo_ref, bo_ref,
                      o_ref,
                      qp_ref, m_ref, l_ref, acc_ref,
                      *, heads, approx_recip):
    ki = pl.program_id(2)
    nk = pl.num_programs(2)

    @pl.when(ki == 0)
    def _init():
        q = q_ref[0]                                       # (tq, D), compute dtype
        for h in range(heads):                             # static unroll
            # per-head Q projection; 1/sqrt(d_k) already folded into Wq/bq
            qp = jnp.dot(q, wq_ref[h],
                         preferred_element_type=jnp.float32) + bq_ref[h]
            qp_ref[h] = qp.astype(qp_ref.dtype)
        m_ref[...] = jnp.full(m_ref.shape, -jnp.inf, dtype=m_ref.dtype)
        l_ref[...] = jnp.zeros(l_ref.shape, dtype=l_ref.dtype)
        acc_ref[...] = jnp.zeros(acc_ref.shape, dtype=acc_ref.dtype)

    k = k_ref[0]                                           # (tk, D)
    v = v_ref[0]                                           # (tk, D)

    for h in range(heads):                                 # static unroll over heads
        # per-head K/V projections of this KV tile (weights already (in, d_k))
        kh = (jnp.dot(k, wk_ref[h], preferred_element_type=jnp.float32)
              + bk_ref[h]).astype(k.dtype)                 # (tk, d_k)
        vh = (jnp.dot(v, wv_ref[h], preferred_element_type=jnp.float32)
              + bv_ref[h]).astype(v.dtype)                 # (tk, d_k)
        qh = qp_ref[h]                                     # (tq, d_k)

        # scores = qh @ kh^T without materializing a transposed copy of kh
        s = lax.dot_general(qh, kh, (((1,), (1,)), ((), ())),
                            preferred_element_type=jnp.float32)   # (tq, tk) fp32

        # online softmax (stats kept in fp32)
        m_prev = m_ref[h]                                  # (tq, 1)
        m_new = jnp.maximum(m_prev, jnp.max(s, axis=-1, keepdims=True))
        alpha = jnp.exp(m_prev - m_new)                    # (tq, 1)
        p = jnp.exp(s - m_new)                             # (tq, tk)
        l_ref[h] = alpha * l_ref[h] + jnp.sum(p, axis=-1, keepdims=True)
        acc_ref[h] = alpha * acc_ref[h] + jnp.dot(
            p.astype(vh.dtype), vh, preferred_element_type=jnp.float32)
        m_ref[h] = m_new
        # TODO(synk): attention-weight dropout (p=0.1) omitted -- eval-mode semantics.

    @pl.when(ki == nk - 1)
    def _finalize():
        out = bo_ref[...].astype(jnp.float32)              # (1, D) -> broadcasts
        for h in range(heads):
            # normalize the small (tq, d_k) accumulator, not the (tq, tk) probs
            inv_l = pl.reciprocal(l_ref[h], approx=approx_recip)   # (tq, 1)
            head_out = (acc_ref[h] * inv_l).astype(wo_ref.dtype)   # (tq, d_k)
            # fused output projection: no lane-dim concat of heads
            out = out + jnp.dot(head_out, wo_ref[h],
                                preferred_element_type=jnp.float32)  # (tq, D)
        o_ref[0] = out.astype(o_ref.dtype)


def multi_head_attention(q, k, v, params, *, heads,
                         tq=None, tk=None,
                         compute_dtype=jnp.bfloat16):
    """q, k, v: (B, S, D). params: PyTorch-convention Linear weights (out,in) / biases (out,)."""
    B, S, D = q.shape
    d_k = D // heads
    assert heads * d_k == D

    # Tile sizes for the flash-style q/kv streaming (256 suits v6e/v7x MXUs;
    # tiny S just uses the whole sequence).
    def _tile(pref):
        if S <= pref:
            return S
        return pref if S % pref == 0 else S
    tq = _tile(256) if tq is None else tq
    tk = _tile(256) if tk is None else tk
    assert S % tq == 0 and S % tk == 0

    cd = compute_dtype
    scale = 1.0 / math.sqrt(d_k)

    # nn.Linear computes y = x @ W.T + b with W:(out, in).  Pre-transpose to
    # (in, out) and split the out axis per head so the kernel never transposes
    # or lane-slices:  w_h[h] : (D, d_k) with  x @ w_h[h] == (x @ W.T)[:, h*d_k:(h+1)*d_k].
    def split_proj(w):                       # (out, in) -> (heads, in, d_k)
        return jnp.transpose(w.reshape(heads, d_k, D), (0, 2, 1))

    wq = (split_proj(params["wq"]) * scale).astype(cd)     # fold 1/sqrt(d_k) into Wq
    wk = split_proj(params["wk"]).astype(cd)
    wv = split_proj(params["wv"]).astype(cd)
    bq = (params["bq"].reshape(heads, 1, d_k) * scale).astype(jnp.float32)
    bk = params["bk"].reshape(heads, 1, d_k).astype(jnp.float32)
    bv = params["bv"].reshape(heads, 1, d_k).astype(jnp.float32)

    # Output projection split per head: wo_h[h] : (d_k, D), so
    # concat @ Wo.T == sum_h head_out_h @ wo_h[h]  (no concat needed).
    wo = jnp.transpose(params["wo"].reshape(D, heads, d_k), (1, 2, 0)).astype(cd)
    bo = params["bo"].reshape(1, D).astype(jnp.float32)

    qc, kc, vc = q.astype(cd), k.astype(cd), v.astype(cd)

    kernel = functools.partial(_mha_flash_kernel, heads=heads,
                               approx_recip=(cd == jnp.bfloat16))

    q_spec = pl.BlockSpec((1, tq, D), lambda b, qi, ki: (b, qi, 0))
    kv_spec = pl.BlockSpec((1, tk, D), lambda b, qi, ki: (b, ki, 0))
    # Weights/biases are grid-invariant (constant index map -> not re-DMA'd).
    # TODO(synk): on v7x, consider pipeline_mode=pl.Buffered(1) on the weight
    # specs to single-buffer the grid-invariant weights and reclaim VMEM.
    wp_spec = pl.BlockSpec((heads, D, d_k), lambda b, qi, ki: (0, 0, 0))
    bp_spec = pl.BlockSpec((heads, 1, d_k), lambda b, qi, ki: (0, 0, 0))
    wo_spec = pl.BlockSpec((heads, d_k, D), lambda b, qi, ki: (0, 0, 0))
    bo_spec = pl.BlockSpec((1, D), lambda b, qi, ki: (0, 0))
    o_spec = pl.BlockSpec((1, tq, D), lambda b, qi, ki: (b, qi, 0))

    return pl.pallas_call(
        kernel,
        out_shape=jax.ShapeDtypeStruct((B, S, D), q.dtype),
        grid_spec=pltpu.PrefetchScalarGridSpec(
            num_scalar_prefetch=0,
            grid=(B, S // tq, S // tk),
            in_specs=[q_spec, kv_spec, kv_spec,
                      wp_spec, bp_spec,     # q_linear (scale folded in)
                      wp_spec, bp_spec,     # k_linear
                      wp_spec, bp_spec,     # v_linear
                      wo_spec, bo_spec],    # out linear
            out_specs=o_spec,
            scratch_shapes=[
                pltpu.VMEM((heads, tq, d_k), cd),            # cached Q projection
                pltpu.VMEM((heads, tq, 1), jnp.float32),     # running max
                pltpu.VMEM((heads, tq, 1), jnp.float32),     # running denominator
                pltpu.VMEM((heads, tq, d_k), jnp.float32),   # unnormalized P @ V
            ]),
        compiler_params=pltpu.CompilerParams(
            dimension_semantics=("parallel", "parallel", "arbitrary")),
    )(qc, kc, vc, wq, bq, wk, bk, wv, bv, wo, bo)


def _reference(q, k, v, params, *, heads):
    """Pure-JAX reference mirroring the PyTorch forward (eval mode)."""
    B, S, D = q.shape
    d_k = D // heads

    def lin(x, w, b):
        return jnp.einsum("bsd,od->bso", x, w) + b

    qp = lin(q, params["wq"], params["bq"]).reshape(B, S, heads, d_k).transpose(0, 2, 1, 3)
    kp = lin(k, params["wk"], params["bk"]).reshape(B, S, heads, d_k).transpose(0, 2, 1, 3)
    vp = lin(v, params["wv"], params["bv"]).reshape(B, S, heads, d_k).transpose(0, 2, 1, 3)

    scores = jnp.einsum("bhqd,bhkd->bhqk", qp, kp) / math.sqrt(d_k)
    attn = jax.nn.softmax(scores, axis=-1)
    out = jnp.einsum("bhqk,bhkd->bhqd", attn, vp)
    concat = out.transpose(0, 2, 1, 3).reshape(B, S, D)
    return jnp.einsum("bsd,od->bso", concat, params["wo"]) + params["bo"]


def _init_params(key, d_model):
    """Deterministic init; nn.Linear-shaped weights (out, in) and biases (out,)."""
    keys = jax.random.split(key, 8)
    bound = 1.0 / math.sqrt(d_model)

    def u(k, shape):
        return jax.random.uniform(k, shape, jnp.float32, -bound, bound)

    return {
        "wq": u(keys[0], (d_model, d_model)), "bq": u(keys[1], (d_model,)),
        "wk": u(keys[2], (d_model, d_model)), "bk": u(keys[3], (d_model,)),
        "wv": u(keys[4], (d_model, d_model)), "bv": u(keys[5], (d_model,)),
        "wo": u(keys[6], (d_model, d_model)), "bo": u(keys[7], (d_model,)),
    }


if __name__ == "__main__":
    B, S, D, HEADS = 2, 8, 32, 4

    root = jax.random.PRNGKey(0)
    kq, kk, kv, kp = jax.random.split(root, 4)
    q = jax.random.normal(kq, (B, S, D), jnp.float32)
    k = jax.random.normal(kk, (B, S, D), jnp.float32)
    v = jax.random.normal(kv, (B, S, D), jnp.float32)
    params = _init_params(kp, D)

    ref = _reference(q, k, v, params, heads=HEADS)

    # default bf16 MXU path (softmax stats in fp32)
    out = jax.block_until_ready(multi_head_attention(q, k, v, params, heads=HEADS))
    assert out.shape == (B, S, D)
    assert jnp.allclose(out, ref, atol=5e-2, rtol=5e-2), "bf16 kernel mismatch vs reference"

    # fp32 path for exact parity with the PyTorch forward
    out_f32 = jax.block_until_ready(
        multi_head_attention(q, k, v, params, heads=HEADS, compute_dtype=jnp.float32))
    assert jnp.allclose(out_f32, ref, atol=1e-4, rtol=1e-4), "fp32 kernel mismatch vs reference"

    print("KERNEL_OK")
</pallas_src>

<mosaic_0001>
module attributes {stable_mosaic.version = 11 : i64} {
  func.func @_mha_flash_kernel(%arg0: i32, %arg1: i32, %arg2: i32, %arg3: memref<1x8x32xbf16, #tpu.memory_space<vmem>>, %arg4: memref<1x8x32xbf16, #tpu.memory_space<vmem>>, %arg5: memref<1x8x32xbf16, #tpu.memory_space<vmem>>, %arg6: memref<4x32x8xbf16, #tpu.memory_space<vmem>>, %arg7: memref<4x1x8xf32, #tpu.memory_space<vmem>>, %arg8: memref<4x32x8xbf16, #tpu.memory_space<vmem>>, %arg9: memref<4x1x8xf32, #tpu.memory_space<vmem>>, %arg10: memref<4x32x8xbf16, #tpu.memory_space<vmem>>, %arg11: memref<4x1x8xf32, #tpu.memory_space<vmem>>, %arg12: memref<4x8x32xbf16, #tpu.memory_space<vmem>>, %arg13: memref<1x32xf32, #tpu.memory_space<vmem>>, %arg14: memref<1x8x32xf32, #tpu.memory_space<vmem>>, %arg15: memref<4x8x8xbf16, #tpu.memory_space<vmem>>, %arg16: memref<4x8x1xf32, #tpu.memory_space<vmem>>, %arg17: memref<4x8x1xf32, #tpu.memory_space<vmem>>, %arg18: memref<4x8x8xf32, #tpu.memory_space<vmem>>) attributes {dimension_semantics = [#tpu.dimension_semantics<parallel>, #tpu.dimension_semantics<parallel>, #tpu.dimension_semantics<arbitrary>], iteration_bounds = array<i64: 2, 1, 1>, scalar_prefetch = 0 : i64, scratch_operands = 4 : i64, tpu.core_type = #tpu.core_type<tc>, window_params = [{transform_indices = @transform_0, window_bounds = array<i64: 1, 8, 32>}, {transform_indices = @transform_1, window_bounds = array<i64: 1, 8, 32>}, {transform_indices = @transform_2, window_bounds = array<i64: 1, 8, 32>}, {pipeline_mode = #tpu.pipeline_mode<synchronous>, transform_indices = @transform_3, window_bounds = array<i64: 4, 32, 8>}, {pipeline_mode = #tpu.pipeline_mode<synchronous>, transform_indices = @transform_4, window_bounds = array<i64: 4, 1, 8>}, {pipeline_mode = #tpu.pipeline_mode<synchronous>, transform_indices = @transform_5, window_bounds = array<i64: 4, 32, 8>}, {pipeline_mode = #tpu.pipeline_mode<synchronous>, transform_indices = @transform_6, window_bounds = array<i64: 4, 1, 8>}, {pipeline_mode = #tpu.pipeline_mode<synchronous>, transform_indices = @transform_7, window_bounds = array<i64: 4, 32, 8>}, {pipeline_mode = #tpu.pipeline_mode<synchronous>, transform_indices = @transform_8, window_bounds = array<i64: 4, 1, 8>}, {pipeline_mode = #tpu.pipeline_mode<synchronous>, transform_indices = @transform_9, window_bounds = array<i64: 4, 8, 32>}, {pipeline_mode = #tpu.pipeline_mode<synchronous>, transform_indices = @transform_10, window_bounds = array<i64: 1, 32>}, {transform_indices = @transform_11, window_bounds = array<i64: 1, 8, 32>}]} {
    %c0_i32 = arith.constant 0 : i32
    %0 = arith.cmpi eq, %arg2, %c0_i32 : i32
    %1 = arith.extui %0 : i1 to i32
    %c0_i32_0 = arith.constant 0 : i32
    %2 = arith.cmpi ne, %1, %c0_i32_0 : i32
    scf.if %2 {
      %c0_160 = arith.constant 0 : index
      %c0_161 = arith.constant 0 : index
      %c0_162 = arith.constant 0 : index
      %214 = vector.load %arg3[%c0_160, %c0_161, %c0_162] : memref<1x8x32xbf16, #tpu.memory_space<vmem>>, vector<1x8x32xbf16>
      %215 = vector.shape_cast %214 : vector<1x8x32xbf16> to vector<8x32xbf16>
      %c0_163 = arith.constant 0 : index
      %c0_164 = arith.constant 0 : index
      %c0_165 = arith.constant 0 : index
      %216 = vector.load %arg6[%c0_163, %c0_164, %c0_165] : memref<4x32x8xbf16, #tpu.memory_space<vmem>>, vector<1x32x8xbf16>
      %217 = vector.shape_cast %216 : vector<1x32x8xbf16> to vector<32x8xbf16>
      %cst_166 = arith.constant dense<0.000000e+00> : vector<8x8xf32>
      %218 = tpu.matmul %215, %217, %cst_166 {dimension_numbers = #tpu.dot_dimension_numbers<[1], [0], [0], [1], [0, 0, 1, 1], [], []>} : vector<8x32xbf16>, vector<32x8xbf16>, vector<8x8xf32> -> vector<8x8xf32>
      %c0_167 = arith.constant 0 : index
      %c0_168 = arith.constant 0 : index
      %c0_169 = arith.constant 0 : index
      %219 = vector.load %arg7[%c0_167, %c0_168, %c0_169] : memref<4x1x8xf32, #tpu.memory_space<vmem>>, vector<1x1x8xf32>
      %220 = vector.shape_cast %219 : vector<1x1x8xf32> to vector<1x8xf32>
      %221 = vector.broadcast %220 : vector<1x8xf32> to vector<8x8xf32>
      %222 = arith.addf %218, %221 : vector<8x8xf32>
      %223 = arith.truncf %222 : vector<8x8xf32> to vector<8x8xbf16>
      %c0_170 = arith.constant 0 : index
      %c0_171 = arith.constant 0 : index
      %c0_172 = arith.constant 0 : index
      %224 = vector.load %arg15[%c0_170, %c0_171, %c0_172] : memref<4x8x8xbf16, #tpu.memory_space<vmem>>, vector<1x8x8xbf16>
      %225 = vector.shape_cast %224 : vector<1x8x8xbf16> to vector<8x8xbf16>
      %226 = vector.shape_cast %223 : vector<8x8xbf16> to vector<1x8x8xbf16>
      tpu.vector_store %arg15[%c0_170, %c0_171, %c0_172], %226 {strides = array<i32>} : memref<4x8x8xbf16, #tpu.memory_space<vmem>>, vector<1x8x8xbf16>,
      %c1_173 = arith.constant 1 : index
      %c0_174 = arith.constant 0 : index
      %c0_175 = arith.constant 0 : index
      %227 = vector.load %arg6[%c1_173, %c0_174, %c0_175] : memref<4x32x8xbf16, #tpu.memory_space<vmem>>, vector<1x32x8xbf16>
      %228 = vector.shape_cast %227 : vector<1x32x8xbf16> to vector<32x8xbf16>
      %cst_176 = arith.constant dense<0.000000e+00> : vector<8x8xf32>
      %229 = tpu.matmul %215, %228, %cst_176 {dimension_numbers = #tpu.dot_dimension_numbers<[1], [0], [0], [1], [0, 0, 1, 1], [], []>} : vector<8x32xbf16>, vector<32x8xbf16>, vector<8x8xf32> -> vector<8x8xf32>
      %c1_177 = arith.constant 1 : index
      %c0_178 = arith.constant 0 : index
      %c0_179 = arith.constant 0 : index
      %230 = vector.load %arg7[%c1_177, %c0_178, %c0_179] : memref<4x1x8xf32, #tpu.memory_space<vmem>>, vector<1x1x8xf32>
      %231 = vector.shape_cast %230 : vector<1x1x8xf32> to vector<1x8xf32>
      %232 = vector.broadcast %231 : vector<1x8xf32> to vector<8x8xf32>
      %233 = arith.addf %229, %232 : vector<8x8xf32>
      %234 = arith.truncf %233 : vector<8x8xf32> to vector<8x8xbf16>
      %c1_180 = arith.constant 1 : index
      %c0_181 = arith.constant 0 : index
      %c0_182 = arith.constant 0 : index
      %235 = vector.load %arg15[%c1_180, %c0_181, %c0_182] : memref<4x8x8xbf16, #tpu.memory_space<vmem>>, vector<1x8x8xbf16>
      %236 = vector.shape_cast %235 : vector<1x8x8xbf16> to vector<8x8xbf16>
      %237 = vector.shape_cast %234 : vector<8x8xbf16> to vector<1x8x8xbf16>
      tpu.vector_store %arg15[%c1_180, %c0_181, %c0_182], %237 {strides = array<i32>} : memref<4x8x8xbf16, #tpu.memory_space<vmem>>, vector<1x8x8xbf16>,
      %c2_183 = arith.constant 2 : index
      %c0_184 = arith.constant 0 : index
      %c0_185 = arith.constant 0 : index
      %238 = vector.load %arg6[%c2_183, %c0_184, %c0_185] : memref<4x32x8xbf16, #tpu.memory_space<vmem>>, vector<1x32x8xbf16>
      %239 = vector.shape_cast %238 : vector<1x32x8xbf16> to vector<32x8xbf16>
      %cst_186 = arith.constant dense<0.000000e+00> : vector<8x8xf32>
      %240 = tpu.matmul %215, %239, %cst_186 {dimension_numbers = #tpu.dot_dimension_numbers<[1], [0], [0], [1], [0, 0, 1, 1], [], []>} : vector<8x32xbf16>, vector<32x8xbf16>, vector<8x8xf32> -> vector<8x8xf32>
      %c2_187 = arith.constant 2 : index
      %c0_188 = arith.constant 0 : index
      %c0_189 = arith.constant 0 : index
      %241 = vector.load %arg7[%c2_187, %c0_188, %c0_189] : memref<4x1x8xf32, #tpu.memory_space<vmem>>, vector<1x1x8xf32>
      %242 = vector.shape_cast %241 : vector<1x1x8xf32> to vector<1x8xf32>
      %243 = vector.broadcast %242 : vector<1x8xf32> to vector<8x8xf32>
      %244 = arith.addf %240, %243 : vector<8x8xf32>
      %245 = arith.truncf %244 : vector<8x8xf32> to vector<8x8xbf16>
      %c2_190 = arith.constant 2 : index
      %c0_191 = arith.constant 0 : index
      %c0_192 = arith.constant 0 : index
      %246 = vector.load %arg15[%c2_190, %c0_191, %c0_192] : memref<4x8x8xbf16, #tpu.memory_space<vmem>>, vector<1x8x8xbf16>
      %247 = vector.shape_cast %246 : vector<1x8x8xbf16> to vector<8x8xbf16>
      %248 = vector.shape_cast %245 : vector<8x8xbf16> to vector<1x8x8xbf16>
      tpu.vector_store %arg15[%c2_190, %c0_191, %c0_192], %248 {strides = array<i32>} : memref<4x8x8xbf16, #tpu.memory_space<vmem>>, vector<1x8x8xbf16>,
      %c3_193 = arith.constant 3 : index
      %c0_194 = arith.constant 0 : index
      %c0_195 = arith.constant 0 : index
      %249 = vector.load %arg6[%c3_193, %c0_194, %c0_195] : memref<4x32x8xbf16, #tpu.memory_space<vmem>>, vector<1x32x8xbf16>
      %250 = vector.shape_cast %249 : vector<1x32x8xbf16> to vector<32x8xbf16>
      %cst_196 = arith.constant dense<0.000000e+00> : vector<8x8xf32>
      %251 = tpu.matmul %215, %250, %cst_196 {dimension_numbers = #tpu.dot_dimension_numbers<[1], [0], [0], [1], [0, 0, 1, 1], [], []>} : vector<8x32xbf16>, vector<32x8xbf16>, vector<8x8xf32> -> vector<8x8xf32>
      %c3_197 = arith.constant 3 : index
      %c0_198 = arith.constant 0 : index
      %c0_199 = arith.constant 0 : index
      %252 = vector.load %arg7[%c3_197, %c0_198, %c0_199] : memref<4x1x8xf32, #tpu.memory_space<vmem>>, vector<1x1x8xf32>
      %253 = vector.shape_cast %252 : vector<1x1x8xf32> to vector<1x8xf32>
      %254 = vector.broadcast %253 : vector<1x8xf32> to vector<8x8xf32>
      %255 = arith.addf %251, %254 : vector<8x8xf32>
      %256 = arith.truncf %255 : vector<8x8xf32> to vector<8x8xbf16>
      %c3_200 = arith.constant 3 : index
      %c0_201 = arith.constant 0 : index
      %c0_202 = arith.constant 0 : index
      %257 = vector.load %arg15[%c3_200, %c0_201, %c0_202] : memref<4x8x8xbf16, #tpu.memory_space<vmem>>, vector<1x8x8xbf16>
      %258 = vector.shape_cast %257 : vector<1x8x8xbf16> to vector<8x8xbf16>
      %259 = vector.shape_cast %256 : vector<8x8xbf16> to vector<1x8x8xbf16>
      tpu.vector_store %arg15[%c3_200, %c0_201, %c0_202], %259 {strides = array<i32>} : memref<4x8x8xbf16, #tpu.memory_space<vmem>>, vector<1x8x8xbf16>,
      %cst_203 = arith.constant 0xFF800000 : f32
      %260 = vector.broadcast %cst_203 : f32 to vector<4x8x1xf32>
      %c0_204 = arith.constant 0 : index
      %c0_205 = arith.constant 0 : index
      %c0_206 = arith.constant 0 : index
      %261 = vector.load %arg16[%c0_204, %c0_205, %c0_206] : memref<4x8x1xf32, #tpu.memory_space<vmem>>, vector<4x8x1xf32>
      tpu.vector_store %arg16[%c0_204, %c0_205, %c0_206], %260 {strides = array<i32>} : memref<4x8x1xf32, #tpu.memory_space<vmem>>, vector<4x8x1xf32>,
      %cst_207 = arith.constant 0.000000e+00 : f32
      %262 = vector.broadcast %cst_207 : f32 to vector<4x8x1xf32>
      %c0_208 = arith.constant 0 : index
      %c0_209 = arith.constant 0 : index
      %c0_210 = arith.constant 0 : index
      %263 = vector.load %arg17[%c0_208, %c0_209, %c0_210] : memref<4x8x1xf32, #tpu.memory_space<vmem>>, vector<4x8x1xf32>
      tpu.vector_store %arg17[%c0_208, %c0_209, %c0_210], %262 {strides = array<i32>} : memref<4x8x1xf32, #tpu.memory_space<vmem>>, vector<4x8x1xf32>,
      %cst_211 = arith.constant 0.000000e+00 : f32
      %264 = vector.broadcast %cst_211 : f32 to vector<4x8x8xf32>
      %c0_212 = arith.constant 0 : index
      %c0_213 = arith.constant 0 : index
      %c0_214 = arith.constant 0 : index
      %265 = vector.load %arg18[%c0_212, %c0_213, %c0_214] : memref<4x8x8xf32, #tpu.memory_space<vmem>>, vector<4x8x8xf32>
      tpu.vector_store %arg18[%c0_212, %c0_213, %c0_214], %264 {strides = array<i32>} : memref<4x8x8xf32, #tpu.memory_space<vmem>>, vector<4x8x8xf32>,
    } else {
    }
    %c0 = arith.constant 0 : index
    %c0_1 = arith.constant 0 : index
    %c0_2 = arith.constant 0 : index
    %3 = vector.load %arg4[%c0, %c0_1, %c0_2] : memref<1x8x32xbf16, #tpu.memory_space<vmem>>, vector<1x8x32xbf16>
    %4 = vector.shape_cast %3 : vector<1x8x32xbf16> to vector<8x32xbf16>
    %c0_3 = arith.constant 0 : index
    %c0_4 = arith.constant 0 : index
    %c0_5 = arith.constant 0 : index
    %5 = vector.load %arg5[%c0_3, %c0_4, %c0_5] : memref<1x8x32xbf16, #tpu.memory_space<vmem>>, vector<1x8x32xbf16>
    %6 = vector.shape_cast %5 : vector<1x8x32xbf16> to vector<8x32xbf16>
    %c0_6 = arith.constant 0 : index
    %c0_7 = arith.constant 0 : index
    %c0_8 = arith.constant 0 : index
    %7 = vector.load %arg8[%c0_6, %c0_7, %c0_8] : memref<4x32x8xbf16, #tpu.memory_space<vmem>>, vector<1x32x8xbf16>
    %8 = vector.shape_cast %7 : vector<1x32x8xbf16> to vector<32x8xbf16>
    %cst = arith.constant dense<0.000000e+00> : vector<8x8xf32>
    %9 = tpu.matmul %4, %8, %cst {dimension_numbers = #tpu.dot_dimension_numbers<[1], [0], [0], [1], [0, 0, 1, 1], [], []>} : vector<8x32xbf16>, vector<32x8xbf16>, vector<8x8xf32> -> vector<8x8xf32>
    %c0_9 = arith.constant 0 : index
    %c0_10 = arith.constant 0 : index
    %c0_11 = arith.constant 0 : index
    %10 = vector.load %arg9[%c0_9, %c0_10, %c0_11] : memref<4x1x8xf32, #tpu.memory_space<vmem>>, vector<1x1x8xf32>
    %11 = vector.shape_cast %10 : vector<1x1x8xf32> to vector<1x8xf32>
    %12 = vector.broadcast %11 : vector<1x8xf32> to vector<8x8xf32>
    %13 = arith.addf %9, %12 : vector<8x8xf32>
    %14 = arith.truncf %13 : vector<8x8xf32> to vector<8x8xbf16>
    %c0_12 = arith.constant 0 : index
    %c0_13 = arith.constant 0 : index
    %c0_14 = arith.constant 0 : index
    %15 = vector.load %arg10[%c0_12, %c0_13, %c0_14] : memref<4x32x8xbf16, #tpu.memory_space<vmem>>, vector<1x32x8xbf16>
    %16 = vector.shape_cast %15 : vector<1x32x8xbf16> to vector<32x8xbf16>
    %cst_15 = arith.constant dense<0.000000e+00> : vector<8x8xf32>
    %17 = tpu.matmul %6, %16, %cst_15 {dimension_numbers = #tpu.dot_dimension_numbers<[1], [0], [0], [1], [0, 0, 1, 1], [], []>} : vector<8x32xbf16>, vector<32x8xbf16>, vector<8x8xf32> -> vector<8x8xf32>
    %c0_16 = arith.constant 0 : index
    %c0_17 = arith.constant 0 : index
    %c0_18 = arith.constant 0 : index
    %18 = vector.load %arg11[%c0_16, %c0_17, %c0_18] : memref<4x1x8xf32, #tpu.memory_space<vmem>>, vector<1x1x8xf32>
    %19 = vector.shape_cast %18 : vector<1x1x8xf32> to vector<1x8xf32>
    %20 = vector.broadcast %19 : vector<1x8xf32> to vector<8x8xf32>
    %21 = arith.addf %17, %20 : vector<8x8xf32>
    %22 = arith.truncf %21 : vector<8x8xf32> to vector<8x8xbf16>
    %c0_19 = arith.constant 0 : index
    %c0_20 = arith.constant 0 : index
    %c0_21 = arith.constant 0 : index
    %23 = vector.load %arg15[%c0_19, %c0_20, %c0_21] : memref<4x8x8xbf16, #tpu.memory_space<vmem>>, vector<1x8x8xbf16>
    %24 = vector.shape_cast %23 : vector<1x8x8xbf16> to vector<8x8xbf16>
    %cst_22 = arith.constant dense<0.000000e+00> : vector<8x8xf32>
    %25 = tpu.matmul %24, %14, %cst_22 {dimension_numbers = #tpu.dot_dimension_numbers<[1], [1], [0], [0], [0, 0, 1, 0], [], []>} : vector<8x8xbf16>, vector<8x8xbf16>, vector<8x8xf32> -> vector<8x8xf32>
    %c0_23 = arith.constant 0 : index
    %c0_24 = arith.constant 0 : index
    %c0_25 = arith.constant 0 : index
    %26 = vector.load %arg16[%c0_23, %c0_24, %c0_25] : memref<4x8x1xf32, #tpu.memory_space<vmem>>, vector<1x8x1xf32>
    %27 = vector.shape_cast %26 : vector<1x8x1xf32> to vector<8x1xf32>
    %cst_26 = arith.constant dense<0xFF800000> : vector<8xf32>
    %28 = vector.multi_reduction <maximumf>, %25, %cst_26 [1] : vector<8x8xf32> to vector<8xf32>
    %29 = vector.shape_cast %28 : vector<8xf32> to vector<8x1xf32>
    %30 = arith.maximumf %27, %29 : vector<8x1xf32>
    %31 = arith.subf %27, %30 : vector<8x1xf32>
    %32 = math.exp %31 : vector<8x1xf32>
    %33 = vector.broadcast %30 : vector<8x1xf32> to vector<8x8xf32>
    %34 = arith.subf %25, %33 : vector<8x8xf32>
    %35 = math.exp %34 : vector<8x8xf32>
    %c0_27 = arith.constant 0 : index
    %c0_28 = arith.constant 0 : index
    %c0_29 = arith.constant 0 : index
    %36 = vector.load %arg17[%c0_27, %c0_28, %c0_29] : memref<4x8x1xf32, #tpu.memory_space<vmem>>, vector<1x8x1xf32>
    %37 = vector.shape_cast %36 : vector<1x8x1xf32> to vector<8x1xf32>
    %38 = arith.mulf %32, %37 : vector<8x1xf32>
    %cst_30 = arith.constant dense<0.000000e+00> : vector<8xf32>
    %39 = vector.multi_reduction <add>, %35, %cst_30 [1] : vector<8x8xf32> to vector<8xf32>
    %40 = vector.shape_cast %39 : vector<8xf32> to vector<8x1xf32>
    %41 = arith.addf %38, %40 : vector<8x1xf32>
    %c0_31 = arith.constant 0 : index
    %c0_32 = arith.constant 0 : index
    %c0_33 = arith.constant 0 : index
    %42 = vector.load %arg17[%c0_31, %c0_32, %c0_33] : memref<4x8x1xf32, #tpu.memory_space<vmem>>, vector<1x8x1xf32>
    %43 = vector.shape_cast %42 : vector<1x8x1xf32> to vector<8x1xf32>
    %44 = vector.shape_cast %41 : vector<8x1xf32> to vector<1x8x1xf32>
    tpu.vector_store %arg17[%c0_31, %c0_32, %c0_33], %44 {strides = array<i32>} : memref<4x8x1xf32, #tpu.memory_space<vmem>>, vector<1x8x1xf32>,
    %c0_34 = arith.constant 0 : index
    %c0_35 = arith.constant 0 : index
    %c0_36 = arith.constant 0 : index
    %45 = vector.load %arg18[%c0_34, %c0_35, %c0_36] : memref<4x8x8xf32, #tpu.memory_space<vmem>>, vector<1x8x8xf32>
    %46 = vector.shape_cast %45 : vector<1x8x8xf32> to vector<8x8xf32>
    %47 = vector.broadcast %32 : vector<8x1xf32> to vector<8x8xf32>
    %48 = arith.mulf %47, %46 : vector<8x8xf32>
    %49 = arith.truncf %35 : vector<8x8xf32> to vector<8x8xbf16>
    %cst_37 = arith.constant dense<0.000000e+00> : vector<8x8xf32>
    %50 = tpu.matmul %49, %22, %cst_37 {dimension_numbers = #tpu.dot_dimension_numbers<[1], [0], [0], [1], [0, 0, 1, 1], [], []>} : vector<8x8xbf16>, vector<8x8xbf16>, vector<8x8xf32> -> vector<8x8xf32>
    %51 = arith.addf %48, %50 : vector<8x8xf32>
    %c0_38 = arith.constant 0 : index
    %c0_39 = arith.constant 0 : index
    %c0_40 = arith.constant 0 : index
    %52 = vector.load %arg18[%c0_38, %c0_39, %c0_40] : memref<4x8x8xf32, #tpu.memory_space<vmem>>, vector<1x8x8xf32>
    %53 = vector.shape_cast %52 : vector<1x8x8xf32> to vector<8x8xf32>
    %54 = vector.shape_cast %51 : vector<8x8xf32> to vector<1x8x8xf32>
    tpu.vector_store %arg18[%c0_38, %c0_39, %c0_40], %54 {strides = array<i32>} : memref<4x8x8xf32, #tpu.memory_space<vmem>>, vector<1x8x8xf32>,
    %c0_41 = arith.constant 0 : index
    %c0_42 = arith.constant 0 : index
    %c0_43 = arith.constant 0 : index
    %55 = vector.load %arg16[%c0_41, %c0_42, %c0_43] : memref<4x8x1xf32, #tpu.memory_space<vmem>>, vector<1x8x1xf32>
    %56 = vector.shape_cast %55 : vector<1x8x1xf32> to vector<8x1xf32>
    %57 = vector.shape_cast %30 : vector<8x1xf32> to vector<1x8x1xf32>
    tpu.vector_store %arg16[%c0_41, %c0_42, %c0_43], %57 {strides = array<i32>} : memref<4x8x1xf32, #tpu.memory_space<vmem>>, vector<1x8x1xf32>,
    %c1 = arith.constant 1 : index
    %c0_44 = arith.constant 0 : index
    %c0_45 = arith.constant 0 : index
    %58 = vector.load %arg8[%c1, %c0_44, %c0_45] : memref<4x32x8xbf16, #tpu.memory_space<vmem>>, vector<1x32x8xbf16>
    %59 = vector.shape_cast %58 : vector<1x32x8xbf16> to vector<32x8xbf16>
    %cst_46 = arith.constant dense<0.000000e+00> : vector<8x8xf32>
    %60 = tpu.matmul %4, %59, %cst_46 {dimension_numbers = #tpu.dot_dimension_numbers<[1], [0], [0], [1], [0, 0, 1, 1], [], []>} : vector<8x32xbf16>, vector<32x8xbf16>, vector<8x8xf32> -> vector<8x8xf32>
    %c1_47 = arith.constant 1 : index
    %c0_48 = arith.constant 0 : index
    %c0_49 = arith.constant 0 : index
    %61 = vector.load %arg9[%c1_47, %c0_48, %c0_49] : memref<4x1x8xf32, #tpu.memory_space<vmem>>, vector<1x1x8xf32>
    %62 = vector.shape_cast %61 : vector<1x1x8xf32> to vector<1x8xf32>
    %63 = vector.broadcast %62 : vector<1x8xf32> to vector<8x8xf32>
    %64 = arith.addf %60, %63 : vector<8x8xf32>
    %65 = arith.truncf %64 : vector<8x8xf32> to vector<8x8xbf16>
    %c1_50 = arith.constant 1 : index
    %c0_51 = arith.constant 0 : index
    %c0_52 = arith.constant 0 : index
    %66 = vector.load %arg10[%c1_50, %c0_51, %c0_52] : memref<4x32x8xbf16, #tpu.memory_space<vmem>>, vector<1x32x8xbf16>
    %67 = vector.shape_cast %66 : vector<1x32x8xbf16> to vector<32x8xbf16>
    %cst_53 = arith.constant dense<0.000000e+00> : vector<8x8xf32>
    %68 = tpu.matmul %6, %67, %cst_53 {dimension_numbers = #tpu.dot_dimension_numbers<[1], [0], [0], [1], [0, 0, 1, 1], [], []>} : vector<8x32xbf16>, vector<32x8xbf16>, vector<8x8xf32> -> vector<8x8xf32>
    %c1_54 = arith.constant 1 : index
    %c0_55 = arith.constant 0 : index
    %c0_56 = arith.constant 0 : index
    %69 = vector.load %arg11[%c1_54, %c0_55, %c0_56] : memref<4x1x8xf32, #tpu.memory_space<vmem>>, vector<1x1x8xf32>
    %70 = vector.shape_cast %69 : vector<1x1x8xf32> to vector<1x8xf32>
    %71 = vector.broadcast %70 : vector<1x8xf32> to vector<8x8xf32>
    %72 = arith.addf %68, %71 : vector<8x8xf32>
    %73 = arith.truncf %72 : vector<8x8xf32> to vector<8x8xbf16>
    %c1_57 = arith.constant 1 : index
    %c0_58 = arith.constant 0 : index
    %c0_59 = arith.constant 0 : index
    %74 = vector.load %arg15[%c1_57, %c0_58, %c0_59] : memref<4x8x8xbf16, #tpu.memory_space<vmem>>, vector<1x8x8xbf16>
    %75 = vector.shape_cast %74 : vector<1x8x8xbf16> to vector<8x8xbf16>
    %cst_60 = arith.constant dense<0.000000e+00> : vector<8x8xf32>
    %76 = tpu.matmul %75, %65, %cst_60 {dimension_numbers = #tpu.dot_dimension_numbers<[1], [1], [0], [0], [0, 0, 1, 0], [], []>} : vector<8x8xbf16>, vector<8x8xbf16>, vector<8x8xf32> -> vector<8x8xf32>
    %c1_61 = arith.constant 1 : index
    %c0_62 = arith.constant 0 : index
    %c0_63 = arith.constant 0 : index
    %77 = vector.load %arg16[%c1_61, %c0_62, %c0_63] : memref<4x8x1xf32, #tpu.memory_space<vmem>>, vector<1x8x1xf32>
    %78 = vector.shape_cast %77 : vector<1x8x1xf32> to vector<8x1xf32>
    %cst_64 = arith.constant dense<0xFF800000> : vector<8xf32>
    %79 = vector.multi_reduction <maximumf>, %76, %cst_64 [1] : vector<8x8xf32> to vector<8xf32>
    %80 = vector.shape_cast %79 : vector<8xf32> to vector<8x1xf32>
    %81 = arith.maximumf %78, %80 : vector<8x1xf32>
    %82 = arith.subf %78, %81 : vector<8x1xf32>
    %83 = math.exp %82 : vector<8x1xf32>
    %84 = vector.broadcast %81 : vector<8x1xf32> to vector<8x8xf32>
    %85 = arith.subf %76, %84 : vector<8x8xf32>
    %86 = math.exp %85 : vector<8x8xf32>
    %c1_65 = arith.constant 1 : index
    %c0_66 = arith.constant 0 : index
    %c0_67 = arith.constant 0 : index
    %87 = vector.load %arg17[%c1_65, %c0_66, %c0_67] : memref<4x8x1xf32, #tpu.memory_space<vmem>>, vector<1x8x1xf32>
    %88 = vector.shape_cast %87 : vector<1x8x1xf32> to vector<8x1xf32>
    %89 = arith.mulf %83, %88 : vector<8x1xf32>
    %cst_68 = arith.constant dense<0.000000e+00> : vector<8xf32>
    %90 = vector.multi_reduction <add>, %86, %cst_68 [1] : vector<8x8xf32> to vector<8xf32>
    %91 = vector.shape_cast %90 : vector<8xf32> to vector<8x1xf32>
    %92 = arith.addf %89, %91 : vector<8x1xf32>
    %c1_69 = arith.constant 1 : index
    %c0_70 = arith.constant 0 : index
    %c0_71 = arith.constant 0 : index
    %93 = vector.load %arg17[%c1_69, %c0_70, %c0_71] : memref<4x8x1xf32, #tpu.memory_space<vmem>>, vector<1x8x1xf32>
    %94 = vector.shape_cast %93 : vector<1x8x1xf32> to vector<8x1xf32>
    %95 = vector.shape_cast %92 : vector<8x1xf32> to vector<1x8x1xf32>
    tpu.vector_store %arg17[%c1_69, %c0_70, %c0_71], %95 {strides = array<i32>} : memref<4x8x1xf32, #tpu.memory_space<vmem>>, vector<1x8x1xf32>,
    %c1_72 = arith.constant 1 : index
    %c0_73 = arith.constant 0 : index
    %c0_74 = arith.constant 0 : index
    %96 = vector.load %arg18[%c1_72, %c0_73, %c0_74] : memref<4x8x8xf32, #tpu.memory_space<vmem>>, vector<1x8x8xf32>
    %97 = vector.shape_cast %96 : vector<1x8x8xf32> to vector<8x8xf32>
    %98 = vector.broadcast %83 : vector<8x1xf32> to vector<8x8xf32>
    %99 = arith.mulf %98, %97 : vector<8x8xf32>
    %100 = arith.truncf %86 : vector<8x8xf32> to vector<8x8xbf16>
    %cst_75 = arith.constant dense<0.000000e+00> : vector<8x8xf32>
    %101 = tpu.matmul %100, %73, %cst_75 {dimension_numbers = #tpu.dot_dimension_numbers<[1], [0], [0], [1], [0, 0, 1, 1], [], []>} : vector<8x8xbf16>, vector<8x8xbf16>, vector<8x8xf32> -> vector<8x8xf32>
    %102 = arith.addf %99, %101 : vector<8x8xf32>
    %c1_76 = arith.constant 1 : index
    %c0_77 = arith.constant 0 : index
    %c0_78 = arith.constant 0 : index
    %103 = vector.load %arg18[%c1_76, %c0_77, %c0_78] : memref<4x8x8xf32, #tpu.memory_space<vmem>>, vector<1x8x8xf32>
    %104 = vector.shape_cast %103 : vector<1x8x8xf32> to vector<8x8xf32>
    %105 = vector.shape_cast %102 : vector<8x8xf32> to vector<1x8x8xf32>
    tpu.vector_store %arg18[%c1_76, %c0_77, %c0_78], %105 {strides = array<i32>} : memref<4x8x8xf32, #tpu.memory_space<vmem>>, vector<1x8x8xf32>,
    %c1_79 = arith.constant 1 : index
    %c0_80 = arith.constant 0 : index
    %c0_81 = arith.constant 0 : index
    %106 = vector.load %arg16[%c1_79, %c0_80, %c0_81] : memref<4x8x1xf32, #tpu.memory_space<vmem>>, vector<1x8x1xf32>
    %107 = vector.shape_cast %106 : vector<1x8x1xf32> to vector<8x1xf32>
    %108 = vector.shape_cast %81 : vector<8x1xf32> to vector<1x8x1xf32>
    tpu.vector_store %arg16[%c1_79, %c0_80, %c0_81], %108 {strides = array<i32>} : memref<4x8x1xf32, #tpu.memory_space<vmem>>, vector<1x8x1xf32>,
    %c2 = arith.constant 2 : index
    %c0_82 = arith.constant 0 : index
    %c0_83 = arith.constant 0 : index
    %109 = vector.load %arg8[%c2, %c0_82, %c0_83] : memref<4x32x8xbf16, #tpu.memory_space<vmem>>, vector<1x32x8xbf16>
    %110 = vector.shape_cast %109 : vector<1x32x8xbf16> to vector<32x8xbf16>
    %cst_84 = arith.constant dense<0.000000e+00> : vector<8x8xf32>
    %111 = tpu.matmul %4, %110, %cst_84 {dimension_numbers = #tpu.dot_dimension_numbers<[1], [0], [0], [1], [0, 0, 1, 1], [], []>} : vector<8x32xbf16>, vector<32x8xbf16>, vector<8x8xf32> -> vector<8x8xf32>
    %c2_85 = arith.constant 2 : index
    %c0_86 = arith.constant 0 : index
    %c0_87 = arith.constant 0 : index
    %112 = vector.load %arg9[%c2_85, %c0_86, %c0_87] : memref<4x1x8xf32, #tpu.memory_space<vmem>>, vector<1x1x8xf32>
    %113 = vector.shape_cast %112 : vector<1x1x8xf32> to vector<1x8xf32>
    %114 = vector.broadcast %113 : vector<1x8xf32> to vector<8x8xf32>
    %115 = arith.addf %111, %114 : vector<8x8xf32>
    %116 = arith.truncf %115 : vector<8x8xf32> to vector<8x8xbf16>
    %c2_88 = arith.constant 2 : index
    %c0_89 = arith.constant 0 : index
    %c0_90 = arith.constant 0 : index
    %117 = vector.load %arg10[%c2_88, %c0_89, %c0_90] : memref<4x32x8xbf16, #tpu.memory_space<vmem>>, vector<1x32x8xbf16>
    %118 = vector.shape_cast %117 : vector<1x32x8xbf16> to vector<32x8xbf16>
    %cst_91 = arith.constant dense<0.000000e+00> : vector<8x8xf32>
    %119 = tpu.matmul %6, %118, %cst_91 {dimension_numbers = #tpu.dot_dimension_numbers<[1], [0], [0], [1], [0, 0, 1, 1], [], []>} : vector<8x32xbf16>, vector<32x8xbf16>, vector<8x8xf32> -> vector<8x8xf32>
    %c2_92 = arith.constant 2 : index
    %c0_93 = arith.constant 0 : index
    %c0_94 = arith.constant 0 : index
    %120 = vector.load %arg11[%c2_92, %c0_93, %c0_94] : memref<4x1x8xf32, #tpu.memory_space<vmem>>, vector<1x1x8xf32>
    %121 = vector.shape_cast %120 : vector<1x1x8xf32> to vector<1x8xf32>
    %122 = vector.broadcast %121 : vector<1x8xf32> to vector<8x8xf32>
    %123 = arith.addf %119, %122 : vector<8x8xf32>
    %124 = arith.truncf %123 : vector<8x8xf32> to vector<8x8xbf16>
    %c2_95 = arith.constant 2 : index
    %c0_96 = arith.constant 0 : index
    %c0_97 = arith.constant 0 : index
    %125 = vector.load %arg15[%c2_95, %c0_96, %c0_97] : memref<4x8x8xbf16, #tpu.memory_space<vmem>>, vector<1x8x8xbf16>
    %126 = vector.shape_cast %125 : vector<1x8x8xbf16> to vector<8x8xbf16>
    %cst_98 = arith.constant dense<0.000000e+00> : vector<8x8xf32>
    %127 = tpu.matmul %126, %116, %cst_98 {dimension_numbers = #tpu.dot_dimension_numbers<[1], [1], [0], [0], [0, 0, 1, 0], [], []>} : vector<8x8xbf16>, vector<8x8xbf16>, vector<8x8xf32> -> vector<8x8xf32>
    %c2_99 = arith.constant 2 : index
    %c0_100 = arith.constant 0 : index
    %c0_101 = arith.constant 0 : index
    %128 = vector.load %arg16[%c2_99, %c0_100, %c0_101] : memref<4x8x1xf32, #tpu.memory_space<vmem>>, vector<1x8x1xf32>
    %129 = vector.shape_cast %128 : vector<1x8x1xf32> to vector<8x1xf32>
    %cst_102 = arith.constant dense<0xFF800000> : vector<8xf32>
    %130 = vector.multi_reduction <maximumf>, %127, %cst_102 [1] : vector<8x8xf32> to vector<8xf32>
    %131 = vector.shape_cast %130 : vector<8xf32> to vector<8x1xf32>
    %132 = arith.maximumf %129, %131 : vector<8x1xf32>
    %133 = arith.subf %129, %132 : vector<8x1xf32>
    %134 = math.exp %133 : vector<8x1xf32>
    %135 = vector.broadcast %132 : vector<8x1xf32> to vector<8x8xf32>
    %136 = arith.subf %127, %135 : vector<8x8xf32>
    %137 = math.exp %136 : vector<8x8xf32>
    %c2_103 = arith.constant 2 : index
    %c0_104 = arith.constant 0 : index
    %c0_105 = arith.constant 0 : index
    %138 = vector.load %arg17[%c2_103, %c0_104, %c0_105] : memref<4x8x1xf32, #tpu.memory_space<vmem>>, vector<1x8x1xf32>
    %139 = vector.shape_cast %138 : vector<1x8x1xf32> to vector<8x1xf32>
    %140 = arith.mulf %134, %139 : vector<8x1xf32>
    %cst_106 = arith.constant dense<0.000000e+00> : vector<8xf32>
    %141 = vector.multi_reduction <add>, %137, %cst_106 [1] : vector<8x8xf32> to vector<8xf32>
    %142 = vector.shape_cast %141 : vector<8xf32> to vector<8x1xf32>
    %143 = arith.addf %140, %142 : vector<8x1xf32>
    %c2_107 = arith.constant 2 : index
    %c0_108 = arith.constant 0 : index
    %c0_109 = arith.constant 0 : index
    %144 = vector.load %arg17[%c2_107, %c0_108, %c0_109] : memref<4x8x1xf32, #tpu.memory_space<vmem>>, vector<1x8x1xf32>
    %145 = vector.shape_cast %144 : vector<1x8x1xf32> to vector<8x1xf32>
    %146 = vector.shape_cast %143 : vector<8x1xf32> to vector<1x8x1xf32>
    tpu.vector_store %arg17[%c2_107, %c0_108, %c0_109], %146 {strides = array<i32>} : memref<4x8x1xf32, #tpu.memory_space<vmem>>, vector<1x8x1xf32>,
    %c2_110 = arith.constant 2 : index
    %c0_111 = arith.constant 0 : index
    %c0_112 = arith.constant 0 : index
    %147 = vector.load %arg18[%c2_110, %c0_111, %c0_112] : memref<4x8x8xf32, #tpu.memory_space<vmem>>, vector<1x8x8xf32>
    %148 = vector.shape_cast %147 : vector<1x8x8xf32> to vector<8x8xf32>
    %149 = vector.broadcast %134 : vector<8x1xf32> to vector<8x8xf32>
    %150 = arith.mulf %149, %148 : vector<8x8xf32>
    %151 = arith.truncf %137 : vector<8x8xf32> to vector<8x8xbf16>
    %cst_113 = arith.constant dense<0.000000e+00> : vector<8x8xf32>
    %152 = tpu.matmul %151, %124, %cst_113 {dimension_numbers = #tpu.dot_dimension_numbers<[1], [0], [0], [1], [0, 0, 1, 1], [], []>} : vector<8x8xbf16>, vector<8x8xbf16>, vector<8x8xf32> -> vector<8x8xf32>
    %153 = arith.addf %150, %152 : vector<8x8xf32>
    %c2_114 = arith.constant 2 : index
    %c0_115 = arith.constant 0 : index
    %c0_116 = arith.constant 0 : index
    %154 = vector.load %arg18[%c2_114, %c0_115, %c0_116] : memref<4x8x8xf32, #tpu.memory_space<vmem>>, vector<1x8x8xf32>
    %155 = vector.shape_cast %154 : vector<1x8x8xf32> to vector<8x8xf32>
    %156 = vector.shape_cast %153 : vector<8x8xf32> to vector<1x8x8xf32>
    tpu.vector_store %arg18[%c2_114, %c0_115, %c0_116], %156 {strides = array<i32>} : memref<4x8x8xf32, #tpu.memory_space<vmem>>, vector<1x8x8xf32>,
    %c2_117 = arith.constant 2 : index
    %c0_118 = arith.constant 0 : index
    %c0_119 = arith.constant 0 : index
    %157 = vector.load %arg16[%c2_117, %c0_118, %c0_119] : memref<4x8x1xf32, #tpu.memory_space<vmem>>, vector<1x8x1xf32>
    %158 = vector.shape_cast %157 : vector<1x8x1xf32> to vector<8x1xf32>
    %159 = vector.shape_cast %132 : vector<8x1xf32> to vector<1x8x1xf32>
    tpu.vector_store %arg16[%c2_117, %c0_118, %c0_119], %159 {strides = array<i32>} : memref<4x8x1xf32, #tpu.memory_space<vmem>>, vector<1x8x1xf32>,
    %c3 = arith.constant 3 : index
    %c0_120 = arith.constant 0 : index
    %c0_121 = arith.constant 0 : index
    %160 = vector.load %arg8[%c3, %c0_120, %c0_121] : memref<4x32x8xbf16, #tpu.memory_space<vmem>>, vector<1x32x8xbf16>
    %161 = vector.shape_cast %160 : vector<1x32x8xbf16> to vector<32x8xbf16>
    %cst_122 = arith.constant dense<0.000000e+00> : vector<8x8xf32>
    %162 = tpu.matmul %4, %161, %cst_122 {dimension_numbers = #tpu.dot_dimension_numbers<[1], [0], [0], [1], [0, 0, 1, 1], [], []>} : vector<8x32xbf16>, vector<32x8xbf16>, vector<8x8xf32> -> vector<8x8xf32>
    %c3_123 = arith.constant 3 : index
    %c0_124 = arith.constant 0 : index
    %c0_125 = arith.constant 0 : index
    %163 = vector.load %arg9[%c3_123, %c0_124, %c0_125] : memref<4x1x8xf32, #tpu.memory_space<vmem>>, vector<1x1x8xf32>
    %164 = vector.shape_cast %163 : vector<1x1x8xf32> to vector<1x8xf32>
    %165 = vector.broadcast %164 : vector<1x8xf32> to vector<8x8xf32>
    %166 = arith.addf %162, %165 : vector<8x8xf32>
    %167 = arith.truncf %166 : vector<8x8xf32> to vector<8x8xbf16>
    %c3_126 = arith.constant 3 : index
    %c0_127 = arith.constant 0 : index
    %c0_128 = arith.constant 0 : index
    %168 = vector.load %arg10[%c3_126, %c0_127, %c0_128] : memref<4x32x8xbf16, #tpu.memory_space<vmem>>, vector<1x32x8xbf16>
    %169 = vector.shape_cast %168 : vector<1x32x8xbf16> to vector<32x8xbf16>
    %cst_129 = arith.constant dense<0.000000e+00> : vector<8x8xf32>
    %170 = tpu.matmul %6, %169, %cst_129 {dimension_numbers = #tpu.dot_dimension_numbers<[1], [0], [0], [1], [0, 0, 1, 1], [], []>} : vector<8x32xbf16>, vector<32x8xbf16>, vector<8x8xf32> -> vector<8x8xf32>
    %c3_130 = arith.constant 3 : index
    %c0_131 = arith.constant 0 : index
    %c0_132 = arith.constant 0 : index
    %171 = vector.load %arg11[%c3_130, %c0_131, %c0_132] : memref<4x1x8xf32, #tpu.memory_space<vmem>>, vector<1x1x8xf32>
    %172 = vector.shape_cast %171 : vector<1x1x8xf32> to vector<1x8xf32>
    %173 = vector.broadcast %172 : vector<1x8xf32> to vector<8x8xf32>
    %174 = arith.addf %170, %173 : vector<8x8xf32>
    %175 = arith.truncf %174 : vector<8x8xf32> to vector<8x8xbf16>
    %c3_133 = arith.constant 3 : index
    %c0_134 = arith.constant 0 : index
    %c0_135 = arith.constant 0 : index
    %176 = vector.load %arg15[%c3_133, %c0_134, %c0_135] : memref<4x8x8xbf16, #tpu.memory_space<vmem>>, vector<1x8x8xbf16>
    %177 = vector.shape_cast %176 : vector<1x8x8xbf16> to vector<8x8xbf16>
    %cst_136 = arith.constant dense<0.000000e+00> : vector<8x8xf32>
    %178 = tpu.matmul %177, %167, %cst_136 {dimension_numbers = #tpu.dot_dimension_numbers<[1], [1], [0], [0], [0, 0, 1, 0], [], []>} : vector<8x8xbf16>, vector<8x8xbf16>, vector<8x8xf32> -> vector<8x8xf32>
    %c3_137 = arith.constant 3 : index
    %c0_138 = arith.constant 0 : index
    %c0_139 = arith.constant 0 : index
    %179 = vector.load %arg16[%c3_137, %c0_138, %c0_139] : memref<4x8x1xf32, #tpu.memory_space<vmem>>, vector<1x8x1xf32>
    %180 = vector.shape_cast %179 : vector<1x8x1xf32> to vector<8x1xf32>
    %cst_140 = arith.constant dense<0xFF800000> : vector<8xf32>
    %181 = vector.multi_reduction <maximumf>, %178, %cst_140 [1] : vector<8x8xf32> to vector<8xf32>
    %182 = vector.shape_cast %181 : vector<8xf32> to vector<8x1xf32>
    %183 = arith.maximumf %180, %182 : vector<8x1xf32>
    %184 = arith.subf %180, %183 : vector<8x1xf32>
    %185 = math.exp %184 : vector<8x1xf32>
    %186 = vector.broadcast %183 : vector<8x1xf32> to vector<8x8xf32>
    %187 = arith.subf %178, %186 : vector<8x8xf32>
    %188 = math.exp %187 : vector<8x8xf32>
    %c3_141 = arith.constant 3 : index
    %c0_142 = arith.constant 0 : index
    %c0_143 = arith.constant 0 : index
    %189 = vector.load %arg17[%c3_141, %c0_142, %c0_143] : memref<4x8x1xf32, #tpu.memory_space<vmem>>, vector<1x8x1xf32>
    %190 = vector.shape_cast %189 : vector<1x8x1xf32> to vector<8x1xf32>
    %191 = arith.mulf %185, %190 : vector<8x1xf32>
    %cst_144 = arith.constant dense<0.000000e+00> : vector<8xf32>
    %192 = vector.multi_reduction <add>, %188, %cst_144 [1] : vector<8x8xf32> to vector<8xf32>
    %193 = vector.shape_cast %192 : vector<8xf32> to vector<8x1xf32>
    %194 = arith.addf %191, %193 : vector<8x1xf32>
    %c3_145 = arith.constant 3 : index
    %c0_146 = arith.constant 0 : index
    %c0_147 = arith.constant 0 : index
    %195 = vector.load %arg17[%c3_145, %c0_146, %c0_147] : memref<4x8x1xf32, #tpu.memory_space<vmem>>, vector<1x8x1xf32>
    %196 = vector.shape_cast %195 : vector<1x8x1xf32> to vector<8x1xf32>
    %197 = vector.shape_cast %194 : vector<8x1xf32> to vector<1x8x1xf32>
    tpu.vector_store %arg17[%c3_145, %c0_146, %c0_147], %197 {strides = array<i32>} : memref<4x8x1xf32, #tpu.memory_space<vmem>>, vector<1x8x1xf32>,
    %c3_148 = arith.constant 3 : index
    %c0_149 = arith.constant 0 : index
    %c0_150 = arith.constant 0 : index
    %198 = vector.load %arg18[%c3_148, %c0_149, %c0_150] : memref<4x8x8xf32, #tpu.memory_space<vmem>>, vector<1x8x8xf32>
    %199 = vector.shape_cast %198 : vector<1x8x8xf32> to vector<8x8xf32>
    %200 = vector.broadcast %185 : vector<8x1xf32> to vector<8x8xf32>
    %201 = arith.mulf %200, %199 : vector<8x8xf32>
    %202 = arith.truncf %188 : vector<8x8xf32> to vector<8x8xbf16>
    %cst_151 = arith.constant dense<0.000000e+00> : vector<8x8xf32>
    %203 = tpu.matmul %202, %175, %cst_151 {dimension_numbers = #tpu.dot_dimension_numbers<[1], [0], [0], [1], [0, 0, 1, 1], [], []>} : vector<8x8xbf16>, vector<8x8xbf16>, vector<8x8xf32> -> vector<8x8xf32>
    %204 = arith.addf %201, %203 : vector<8x8xf32>
    %c3_152 = arith.constant 3 : index
    %c0_153 = arith.constant 0 : index
    %c0_154 = arith.constant 0 : index
    %205 = vector.load %arg18[%c3_152, %c0_153, %c0_154] : memref<4x8x8xf32, #tpu.memory_space<vmem>>, vector<1x8x8xf32>
    %206 = vector.shape_cast %205 : vector<1x8x8xf32> to vector<8x8xf32>
    %207 = vector.shape_cast %204 : vector<8x8xf32> to vector<1x8x8xf32>
    tpu.vector_store %arg18[%c3_152, %c0_153, %c0_154], %207 {strides = array<i32>} : memref<4x8x8xf32, #tpu.memory_space<vmem>>, vector<1x8x8xf32>,
    %c3_155 = arith.constant 3 : index
    %c0_156 = arith.constant 0 : index
    %c0_157 = arith.constant 0 : index
    %208 = vector.load %arg16[%c3_155, %c0_156, %c0_157] : memref<4x8x1xf32, #tpu.memory_space<vmem>>, vector<1x8x1xf32>
    %209 = vector.shape_cast %208 : vector<1x8x1xf32> to vector<8x1xf32>
    %210 = vector.shape_cast %183 : vector<8x1xf32> to vector<1x8x1xf32>
    tpu.vector_store %arg16[%c3_155, %c0_156, %c0_157], %210 {strides = array<i32>} : memref<4x8x1xf32, #tpu.memory_space<vmem>>, vector<1x8x1xf32>,
    %c0_i32_158 = arith.constant 0 : i32
    %211 = arith.cmpi eq, %arg2, %c0_i32_158 : i32
    %212 = arith.extui %211 : i1 to i32
    %c0_i32_159 = arith.constant 0 : i32
    %213 = arith.cmpi ne, %212, %c0_i32_159 : i32
    scf.if %213 {
      %c0_160 = arith.constant 0 : index
      %c0_161 = arith.constant 0 : index
      %214 = vector.load %arg13[%c0_160, %c0_161] : memref<1x32xf32, #tpu.memory_space<vmem>>, vector<1x32xf32>
      %c0_162 = arith.constant 0 : index
      %c0_163 = arith.constant 0 : index
      %c0_164 = arith.constant 0 : index
      %215 = vector.load %arg17[%c0_162, %c0_163, %c0_164] : memref<4x8x1xf32, #tpu.memory_space<vmem>>, vector<1x8x1xf32>
      %216 = vector.shape_cast %215 : vector<1x8x1xf32> to vector<8x1xf32>
      %217 = tpu.reciprocal %216 {approx = true} : vector<8x1xf32> -> vector<8x1xf32>
      %c0_165 = arith.constant 0 : index
      %c0_166 = arith.constant 0 : index
      %c0_167 = arith.constant 0 : index
      %218 = vector.load %arg18[%c0_165, %c0_166, %c0_167] : memref<4x8x8xf32, #tpu.memory_space<vmem>>, vector<1x8x8xf32>
      %219 = vector.shape_cast %218 : vector<1x8x8xf32> to vector<8x8xf32>
      %220 = vector.broadcast %217 : vector<8x1xf32> to vector<8x8xf32>
      %221 = arith.mulf %219, %220 : vector<8x8xf32>
      %222 = arith.truncf %221 : vector<8x8xf32> to vector<8x8xbf16>
      %c0_168 = arith.constant 0 : index
      %c0_169 = arith.constant 0 : index
      %c0_170 = arith.constant 0 : index
      %223 = vector.load %arg12[%c0_168, %c0_169, %c0_170] : memref<4x8x32xbf16, #tpu.memory_space<vmem>>, vector<1x8x32xbf16>
      %224 = vector.shape_cast %223 : vector<1x8x32xbf16> to vector<8x32xbf16>
      %cst_171 = arith.constant dense<0.000000e+00> : vector<8x32xf32>
      %225 = tpu.matmul %222, %224, %cst_171 {dimension_numbers = #tpu.dot_dimension_numbers<[1], [0], [0], [1], [0, 0, 1, 1], [], []>} : vector<8x8xbf16>, vector<8x32xbf16>, vector<8x32xf32> -> vector<8x32xf32>
      %226 = vector.broadcast %214 : vector<1x32xf32> to vector<8x32xf32>
      %227 = arith.addf %226, %225 : vector<8x32xf32>
      %c1_172 = arith.constant 1 : index
      %c0_173 = arith.constant 0 : index
      %c0_174 = arith.constant 0 : index
      %228 = vector.load %arg17[%c1_172, %c0_173, %c0_174] : memref<4x8x1xf32, #tpu.memory_space<vmem>>, vector<1x8x1xf32>
      %229 = vector.shape_cast %228 : vector<1x8x1xf32> to vector<8x1xf32>
      %230 = tpu.reciprocal %229 {approx = true} : vector<8x1xf32> -> vector<8x1xf32>
      %c1_175 = arith.constant 1 : index
      %c0_176 = arith.constant 0 : index
      %c0_177 = arith.constant 0 : index
      %231 = vector.load %arg18[%c1_175, %c0_176, %c0_177] : memref<4x8x8xf32, #tpu.memory_space<vmem>>, vector<1x8x8xf32>
      %232 = vector.shape_cast %231 : vector<1x8x8xf32> to vector<8x8xf32>
      %233 = vector.broadcast %230 : vector<8x1xf32> to vector<8x8xf32>
      %234 = arith.mulf %232, %233 : vector<8x8xf32>
      %235 = arith.truncf %234 : vector<8x8xf32> to vector<8x8xbf16>
      %c1_178 = arith.constant 1 : index
      %c0_179 = arith.constant 0 : index
      %c0_180 = arith.constant 0 : index
      %236 = vector.load %arg12[%c1_178, %c0_179, %c0_180] : memref<4x8x32xbf16, #tpu.memory_space<vmem>>, vector<1x8x32xbf16>
      %237 = vector.shape_cast %236 : vector<1x8x32xbf16> to vector<8x32xbf16>
      %cst_181 = arith.constant dense<0.000000e+00> : vector<8x32xf32>
      %238 = tpu.matmul %235, %237, %cst_181 {dimension_numbers = #tpu.dot_dimension_numbers<[1], [0], [0], [1], [0, 0, 1, 1], [], []>} : vector<8x8xbf16>, vector<8x32xbf16>, vector<8x32xf32> -> vector<8x32xf32>
      %239 = arith.addf %227, %238 : vector<8x32xf32>
      %c2_182 = arith.constant 2 : index
      %c0_183 = arith.constant 0 : index
      %c0_184 = arith.constant 0 : index
      %240 = vector.load %arg17[%c2_182, %c0_183, %c0_184] : memref<4x8x1xf32, #tpu.memory_space<vmem>>, vector<1x8x1xf32>
      %241 = vector.shape_cast %240 : vector<1x8x1xf32> to vector<8x1xf32>
      %242 = tpu.reciprocal %241 {approx = true} : vector<8x1xf32> -> vector<8x1xf32>
      %c2_185 = arith.constant 2 : index
      %c0_186 = arith.constant 0 : index
      %c0_187 = arith.constant 0 : index
      %243 = vector.load %arg18[%c2_185, %c0_186, %c0_187] : memref<4x8x8xf32, #tpu.memory_space<vmem>>, vector<1x8x8xf32>
      %244 = vector.shape_cast %243 : vector<1x8x8xf32> to vector<8x8xf32>
      %245 = vector.broadcast %242 : vector<8x1xf32> to vector<8x8xf32>
      %246 = arith.mulf %244, %245 : vector<8x8xf32>
      %247 = arith.truncf %246 : vector<8x8xf32> to vector<8x8xbf16>
      %c2_188 = arith.constant 2 : index
      %c0_189 = arith.constant 0 : index
      %c0_190 = arith.constant 0 : index
      %248 = vector.load %arg12[%c2_188, %c0_189, %c0_190] : memref<4x8x32xbf16, #tpu.memory_space<vmem>>, vector<1x8x32xbf16>
      %249 = vector.shape_cast %248 : vector<1x8x32xbf16> to vector<8x32xbf16>
      %cst_191 = arith.constant dense<0.000000e+00> : vector<8x32xf32>
      %250 = tpu.matmul %247, %249, %cst_191 {dimension_numbers = #tpu.dot_dimension_numbers<[1], [0], [0], [1], [0, 0, 1, 1], [], []>} : vector<8x8xbf16>, vector<8x32xbf16>, vector<8x32xf32> -> vector<8x32xf32>
      %251 = arith.addf %239, %250 : vector<8x32xf32>
      %c3_192 = arith.constant 3 : index
      %c0_193 = arith.constant 0 : index
      %c0_194 = arith.constant 0 : index
      %252 = vector.load %arg17[%c3_192, %c0_193, %c0_194] : memref<4x8x1xf32, #tpu.memory_space<vmem>>, vector<1x8x1xf32>
      %253 = vector.shape_cast %252 : vector<1x8x1xf32> to vector<8x1xf32>
      %254 = tpu.reciprocal %253 {approx = true} : vector<8x1xf32> -> vector<8x1xf32>
      %c3_195 = arith.constant 3 : index
      %c0_196 = arith.constant 0 : index
      %c0_197 = arith.constant 0 : index
      %255 = vector.load %arg18[%c3_195, %c0_196, %c0_197] : memref<4x8x8xf32, #tpu.memory_space<vmem>>, vector<1x8x8xf32>
      %256 = vector.shape_cast %255 : vector<1x8x8xf32> to vector<8x8xf32>
      %257 = vector.broadcast %254 : vector<8x1xf32> to vector<8x8xf32>
      %258 = arith.mulf %256, %257 : vector<8x8xf32>
      %259 = arith.truncf %258 : vector<8x8xf32> to vector<8x8xbf16>
      %c3_198 = arith.constant 3 : index
      %c0_199 = arith.constant 0 : index
      %c0_200 = arith.constant 0 : index
      %260 = vector.load %arg12[%c3_198, %c0_199, %c0_200] : memref<4x8x32xbf16, #tpu.memory_space<vmem>>, vector<1x8x32xbf16>
      %261 = vector.shape_cast %260 : vector<1x8x32xbf16> to vector<8x32xbf16>
      %cst_201 = arith.constant dense<0.000000e+00> : vector<8x32xf32>
      %262 = tpu.matmul %259, %261, %cst_201 {dimension_numbers = #tpu.dot_dimension_numbers<[1], [0], [0], [1], [0, 0, 1, 1], [], []>} : vector<8x8xbf16>, vector<8x32xbf16>, vector<8x32xf32> -> vector<8x32xf32>
      %263 = arith.addf %251, %262 : vector<8x32xf32>
      %c0_202 = arith.constant 0 : index
      %c0_203 = arith.constant 0 : index
      %c0_204 = arith.constant 0 : index
      %264 = vector.load %arg14[%c0_202, %c0_203, %c0_204] : memref<1x8x32xf32, #tpu.memory_space<vmem>>, vector<1x8x32xf32>
      %265 = vector.shape_cast %264 : vector<1x8x32xf32> to vector<8x32xf32>
      %266 = vector.shape_cast %263 : vector<8x32xf32> to vector<1x8x32xf32>
      tpu.vector_store %arg14[%c0_202, %c0_203, %c0_204], %266 {strides = array<i32>} : memref<1x8x32xf32, #tpu.memory_space<vmem>>, vector<1x8x32xf32>,
    } else {
    }
    return
  }
  func.func @transform_0(%arg0: i32, %arg1: i32, %arg2: i32) -> (i32, i32, i32) {
    %c0_i32 = arith.constant 0 : i32
    %c0_i32_0 = arith.constant 0 : i32
    return %arg0, %arg1, %c0_i32 : i32, i32, i32
  }
  func.func @transform_1(%arg0: i32, %arg1: i32, %arg2: i32) -> (i32, i32, i32) {
    %c0_i32 = arith.constant 0 : i32
    %c0_i32_0 = arith.constant 0 : i32
    return %arg0, %arg2, %c0_i32 : i32, i32, i32
  }
  func.func @transform_2(%arg0: i32, %arg1: i32, %arg2: i32) -> (i32, i32, i32) {
    %c0_i32 = arith.constant 0 : i32
    %c0_i32_0 = arith.constant 0 : i32
    return %arg0, %arg2, %c0_i32 : i32, i32, i32
  }
  func.func @transform_3(%arg0: i32, %arg1: i32, %arg2: i32) -> (i32, i32, i32) {
    %c0_i32 = arith.constant 0 : i32
    %c0_i32_0 = arith.constant 0 : i32
    %c0_i32_1 = arith.constant 0 : i32
    %c0_i32_2 = arith.constant 0 : i32
    return %c0_i32, %c0_i32_0, %c0_i32_1 : i32, i32, i32
  }
  func.func @transform_4(%arg0: i32, %arg1: i32, %arg2: i32) -> (i32, i32, i32) {
    %c0_i32 = arith.constant 0 : i32
    %c0_i32_0 = arith.constant 0 : i32
    %c0_i32_1 = arith.constant 0 : i32
    %c0_i32_2 = arith.constant 0 : i32
    return %c0_i32, %c0_i32_0, %c0_i32_1 : i32, i32, i32
  }
  func.func @transform_5(%arg0: i32, %arg1: i32, %arg2: i32) -> (i32, i32, i32) {
    %c0_i32 = arith.constant 0 : i32
    %c0_i32_0 = arith.constant 0 : i32
    %c0_i32_1 = arith.constant 0 : i32
    %c0_i32_2 = arith.constant 0 : i32
    return %c0_i32, %c0_i32_0, %c0_i32_1 : i32, i32, i32
  }
  func.func @transform_6(%arg0: i32, %arg1: i32, %arg2: i32) -> (i32, i32, i32) {
    %c0_i32 = arith.constant 0 : i32
    %c0_i32_0 = arith.constant 0 : i32
    %c0_i32_1 = arith.constant 0 : i32
    %c0_i32_2 = arith.constant 0 : i32
    return %c0_i32, %c0_i32_0, %c0_i32_1 : i32, i32, i32
  }
  func.func @transform_7(%arg0: i32, %arg1: i32, %arg2: i32) -> (i32, i32, i32) {
    %c0_i32 = arith.constant 0 : i32
    %c0_i32_0 = arith.constant 0 : i32
    %c0_i32_1 = arith.constant 0 : i32
    %c0_i32_2 = arith.constant 0 : i32
    return %c0_i32, %c0_i32_0, %c0_i32_1 : i32, i32, i32
  }
  func.func @transform_8(%arg0: i32, %arg1: i32, %arg2: i32) -> (i32, i32, i32) {
    %c0_i32 = arith.constant 0 : i32
    %c0_i32_0 = arith.constant 0 : i32
    %c0_i32_1 = arith.constant 0 : i32
    %c0_i32_2 = arith.constant 0 : i32
    return %c0_i32, %c0_i32_0, %c0_i32_1 : i32, i32, i32
  }
  func.func @transform_9(%arg0: i32, %arg1: i32, %arg2: i32) -> (i32, i32, i32) {
    %c0_i32 = arith.constant 0 : i32
    %c0_i32_0 = arith.constant 0 : i32
    %c0_i32_1 = arith.constant 0 : i32
    %c0_i32_2 = arith.constant 0 : i32
    return %c0_i32, %c0_i32_0, %c0_i32_1 : i32, i32, i32
  }
  func.func @transform_10(%arg0: i32, %arg1: i32, %arg2: i32) -> (i32, i32) {
    %c0_i32 = arith.constant 0 : i32
    %c0_i32_0 = arith.constant 0 : i32
    %c0_i32_1 = arith.constant 0 : i32
    return %c0_i32, %c0_i32_0 : i32, i32
  }
  func.func @transform_11(%arg0: i32, %arg1: i32, %arg2: i32) -> (i32, i32, i32) {
    %c0_i32 = arith.constant 0 : i32
    %c0_i32_0 = arith.constant 0 : i32
    return %arg0, %arg1, %c0_i32 : i32, i32, i32
  }
}

</mosaic_0001>

<llo_original>
// kernel: tpu_custom_call.1
$region0: #{tpu_custom_call.1}
  #allocation0 [shape = 'u32[]', space=smem, size = 0x4, offset = 0x4, fixed_abs, tag = 'smem constant byte address 0x4 - core index']
  #allocation1 [shape = 'u32[144,128]{1,0:T(1,128)}', space=vmem, size = 0x12000, scoped, tag = 'internal scratch']
  #allocation2 [shape = 'bf16[4,8,8]{2,1,0:T(8,128)(2,1)}', space=vmem, size = 0x2000, scoped, tag = 'scratch operand']
  #allocation3 [shape = 'f32[4,8,1]{2,1,0:T(8,128)}', space=vmem, size = 0x4000, scoped, tag = 'scratch operand']
  #allocation4 [shape = 'f32[4,8,1]{2,1,0:T(8,128)}', space=vmem, size = 0x4000, scoped, tag = 'scratch operand']
  #allocation5 [shape = 'f32[4,8,8]{2,1,0:T(8,128)}', space=vmem, size = 0x4000, scoped, tag = 'scratch operand']
  %s0 = inlined_call_operand.vmem [shape: bf16[2,8,32], index: 0, kind: input, shape index: {}]
  %s1 = inlined_call_operand.vmem [shape: bf16[2,8,32], index: 1, kind: input, shape index: {}]
  %s2 = inlined_call_operand.vmem [shape: bf16[2,8,32], index: 2, kind: input, shape index: {}]
  %s3 = inlined_call_operand.vmem [shape: bf16[4,32,8], index: 3, kind: input, shape index: {}]
  %s4 = inlined_call_operand.vmem [shape: f32[4,1,8], index: 4, kind: input, shape index: {}]
  %s5 = inlined_call_operand.vmem [shape: bf16[4,32,8], index: 5, kind: input, shape index: {}]
  %s6 = inlined_call_operand.vmem [shape: f32[4,1,8], index: 6, kind: input, shape index: {}]
  %s7 = inlined_call_operand.vmem [shape: bf16[4,32,8], index: 7, kind: input, shape index: {}]
  %s8 = inlined_call_operand.vmem [shape: f32[4,1,8], index: 8, kind: input, shape index: {}]
  %s9 = inlined_call_operand.vmem [shape: bf16[4,8,32], index: 9, kind: input, shape index: {}]
  %s10 = inlined_call_operand.vmem [shape: f32[1,32], index: 10, kind: input, shape index: {}]
  %s11 = inlined_call_operand.hbm [shape: f32[2,8,32], index: 11, kind: output, shape index: {}]
  %s12 = sld [smem:[#allocation0]]
  $region85: #{tpu_custom_call.1} parent=0
    _
  %s14 = ssub.s32 1, %s12
  %s15 = scalar_select 0, %s14, %s12
  $region1: #{tpu_custom_call.1} parent=0
    #allocation6 [shape = 'u8[8192]{0}', space=vmem, size = 0x2000, scoped, tag = 'output window, operand 0']
    #allocation7 [shape = 's32[2]{0}', space=sflag, size = 0x8, scoped, tag = 'scoped memory for tpu_custom_call.1']
    %16 = vsyncpa [#allocation7], 0
    %s17 = scalar_lea.sflag [#allocation7], 1
    %18 = vsyncpa %s17, 0
    loop: start=0, step=1, limit=4
    $region2: #{tpu_custom_call.1} parent=1 // loop_pre_header
      _
    $region3: #{tpu_custom_call.1} parent=1 // loop_header
      %s20 = sphi 0, %s24
      %p21 = scmp.ge.s32.totalorder %s20, 4
      %s27 = sphi 0, %s46
      %s28 = sphi 0, %s42
      %s29 = sphi 0, %s38
      %s30 = sphi 0, %s27
      %s31 = sphi 0, %s28
      %s32 = sphi 0, %s29
      %s33 = sphi 0, %s30
      %s34 = sphi 0, %s31
      %s35 = sphi 0, %s32
      %s51 = sphi 0, %s53
      %s54 = sphi 0, %s51
      %s55 = sphi 0, %s54
      %s71 = sphi 0, %s55
      %s79 = sphi 0, %s81
      %s82 = sphi 0, %s79
      %s83 = sphi 0, %s82
      %s99 = sphi 0, %s83
      %s107 = sphi 0, %s109
      %s110 = sphi 0, %s107
      %s111 = sphi 0, %s110
      %s127 = sphi 0, %s111
      %s131 = sphi 0, %s131
      %s133 = sphi 0, %s131
      %s134 = sphi 0, %s133
      %s148 = sphi 0, %s134
      %s152 = sphi 0, %s152
      %s154 = sphi 0, %s152
      %s155 = sphi 0, %s154
      %s169 = sphi 0, %s155
      %s173 = sphi 0, %s173
      %s175 = sphi 0, %s173
      %s176 = sphi 0, %s175
      %s190 = sphi 0, %s176
      %s194 = sphi 0, %s194
      %s196 = sphi 0, %s194
      %s197 = sphi 0, %s196
      %s211 = sphi 0, %s197
      %s215 = sphi 0, %s215
      %s217 = sphi 0, %s215
      %s218 = sphi 0, %s217
      %s232 = sphi 0, %s218
      %s236 = sphi 0, %s236
      %s238 = sphi 0, %s236
      %s239 = sphi 0, %s238
      %s253 = sphi 0, %s239
      %s257 = sphi 0, %s257
      %s259 = sphi 0, %s257
      %s260 = sphi 0, %s259
      %s274 = sphi 0, %s260
      %s278 = sphi 0, %s278
      %s280 = sphi 0, %s278
      %s281 = sphi 0, %s280
      %s295 = sphi 0, %s281
      %s303 = sphi 0, %s305
      %s306 = sphi 0, %s303
      %s307 = sphi 0, %s306
      %s323 = sphi 0, %s307
    $region4: #{tpu_custom_call.1} parent=1 // loop_header_branch
      %23 = sbr.rel (%p21) target = $region8
    $region5: #{tpu_custom_call.1} parent=1 // loop_body
      %s25 = ssub.s32 %s20, 1
      %s26 = ssub.s32 %s20, 2
      %s36 = sadd.s32 1, %s29
      %p37 = scmp.ge.s32.totalorder %s36, 1
      %s38 = scalar_select %p37, 0, %s36
      %s39 = sadd.s32 1, %s28
      %s40 = scalar_select %p37, %s39, %s28
      %p41 = scmp.ge.s32.totalorder %s40, 1
      %s42 = scalar_select %p41, 0, %s40
      %s43 = sadd.s32 1, %s27
      %s44 = scalar_select %p41, %s43, %s27
      %p45 = scmp.ge.s32.totalorder %s44, 2
      %s46 = scalar_select %p45, 0, %s44
      %s47 = ssub.s32 %s27, %s46
      %s48 = ssub.s32 %s28, %s42
      %s49 = sor.u32 %s47, %s48
      %p50 = scmp.eq.s32.totalorder %s49, 0
      %s52 = sadd.s32 %s51, 1
      %s53 = scalar_select %p50, %s51, %s52
      %p56 = pneg %p50
      %p57 = scmp.eq.s32.totalorder %s20, 1
      %p58 = por %p56, %p57
      %p59 = scmp.ne.s32.totalorder %s51, %s54
      %p60 = scmp.eq.s32.totalorder %s20, 0
      %p61 = por %p59, %p60
      %p62 = scmp.ne.s32.totalorder %s51, %s54
      %p63 = scmp.eq.s32.totalorder %s25, 1
      %p64 = por %p62, %p63
      %p65 = scmp.ne.s32.totalorder %s54, %s55
      %p66 = scmp.eq.s32.totalorder %s25, 0
      %p67 = por %p65, %p66
      %p68 = scmp.ne.s32.totalorder %s54, %s55
      %p69 = scmp.eq.s32.totalorder %s26, 1
      %p70 = por %p68, %p69
      %p72 = scmp.ne.s32.totalorder %s55, %s71
      %p73 = scmp.eq.s32.totalorder %s26, 0
      %p74 = por %p72, %p73
      %s75 = ssub.s32 %s27, %s46
      %s76 = ssub.s32 %s29, %s38
      %s77 = sor.u32 %s75, %s76
      %p78 = scmp.eq.s32.totalorder %s77, 0
      %s80 = sadd.s32 %s79, 1
      %s81 = scalar_select %p78, %s79, %s80
      %p84 = pneg %p78
      %p85 = scmp.eq.s32.totalorder %s20, 1
      %p86 = por %p84, %p85
      %p87 = scmp.ne.s32.totalorder %s79, %s82
      %p88 = scmp.eq.s32.totalorder %s20, 0
      %p89 = por %p87, %p88
      %p90 = scmp.ne.s32.totalorder %s79, %s82
      %p91 = scmp.eq.s32.totalorder %s25, 1
      %p92 = por %p90, %p91
      %p93 = scmp.ne.s32.totalorder %s82, %s83
      %p94 = scmp.eq.s32.totalorder %s25, 0
      %p95 = por %p93, %p94
      %p96 = scmp.ne.s32.totalorder %s82, %s83
      %p97 = scmp.eq.s32.totalorder %s26, 1
      %p98 = por %p96, %p97
      %p100 = scmp.ne.s32.totalorder %s83, %s99
      %p101 = scmp.eq.s32.totalorder %s26, 0
      %p102 = por %p100, %p101
      %s103 = ssub.s32 %s27, %s46
      %s104 = ssub.s32 %s29, %s38
      %s105 = sor.u32 %s103, %s104
      %p106 = scmp.eq.s32.totalorder %s105, 0
      %s108 = sadd.s32 %s107, 1
      %s109 = scalar_select %p106, %s107, %s108
      %p112 = pneg %p106
      %p113 = scmp.eq.s32.totalorder %s20, 1
      %p114 = por %p112, %p113
      %p115 = scmp.ne.s32.totalorder %s107, %s110
      %p116 = scmp.eq.s32.totalorder %s20, 0
      %p117 = por %p115, %p116
      %p118 = scmp.ne.s32.totalorder %s107, %s110
      %p119 = scmp.eq.s32.totalorder %s25, 1
      %p120 = por %p118, %p119
      %p121 = scmp.ne.s32.totalorder %s110, %s111
      %p122 = scmp.eq.s32.totalorder %s25, 0
      %p123 = por %p121, %p122
      %p124 = scmp.ne.s32.totalorder %s110, %s111
      %p125 = scmp.eq.s32.totalorder %s26, 1
      %p126 = por %p124, %p125
      %p128 = scmp.ne.s32.totalorder %s111, %s127
      %p129 = scmp.eq.s32.totalorder %s26, 0
      %p130 = por %p128, %p129
      %s132 = sadd.s32 %s131, 1
      %p135 = scmp.eq.s32.totalorder %s20, 1
      %p136 = scmp.ne.s32.totalorder %s131, %s133
      %p137 = scmp.eq.s32.totalorder %s20, 0
      %p138 = por %p136, %p137
      %p139 = scmp.ne.s32.totalorder %s131, %s133
      %p140 = scmp.eq.s32.totalorder %s25, 1
      %p141 = por %p139, %p140
      %p142 = scmp.ne.s32.totalorder %s133, %s134
      %p143 = scmp.eq.s32.totalorder %s25, 0
      %p144 = por %p142, %p143
      %p145 = scmp.ne.s32.totalorder %s133, %s134
      %p146 = scmp.eq.s32.totalorder %s26, 1
      %p147 = por %p145, %p146
      %p149 = scmp.ne.s32.totalorder %s134, %s148
      %p150 = scmp.eq.s32.totalorder %s26, 0
      %p151 = por %p149, %p150
      %s153 = sadd.s32 %s152, 1
      %p156 = scmp.eq.s32.totalorder %s20, 1
      %p157 = scmp.ne.s32.totalorder %s152, %s154
      %p158 = scmp.eq.s32.totalorder %s20, 0
      %p159 = por %p157, %p158
      %p160 = scmp.ne.s32.totalorder %s152, %s154
      %p161 = scmp.eq.s32.totalorder %s25, 1
      %p162 = por %p160, %p161
      %p163 = scmp.ne.s32.totalorder %s154, %s155
      %p164 = scmp.eq.s32.totalorder %s25, 0
      %p165 = por %p163, %p164
      %p166 = scmp.ne.s32.totalorder %s154, %s155
      %p167 = scmp.eq.s32.totalorder %s26, 1
      %p168 = por %p166, %p167
      %p170 = scmp.ne.s32.totalorder %s155, %s169
      %p171 = scmp.eq.s32.totalorder %s26, 0
      %p172 = por %p170, %p171
      %s174 = sadd.s32 %s173, 1
      %p177 = scmp.eq.s32.totalorder %s20, 1
      %p178 = scmp.ne.s32.totalorder %s173, %s175
      %p179 = scmp.eq.s32.totalorder %s20, 0
      %p180 = por %p178, %p179
      %p181 = scmp.ne.s32.totalorder %s173, %s175
      %p182 = scmp.eq.s32.totalorder %s25, 1
      %p183 = por %p181, %p182
      %p184 = scmp.ne.s32.totalorder %s175, %s176
      %p185 = scmp.eq.s32.totalorder %s25, 0
      %p186 = por %p184, %p185
      %p187 = scmp.ne.s32.totalorder %s175, %s176
      %p188 = scmp.eq.s32.totalorder %s26, 1
      %p189 = por %p187, %p188
      %p191 = scmp.ne.s32.totalorder %s176, %s190
      %p192 = scmp.eq.s32.totalorder %s26, 0
      %p193 = por %p191, %p192
      %s195 = sadd.s32 %s194, 1
      %p198 = scmp.eq.s32.totalorder %s20, 1
      %p199 = scmp.ne.s32.totalorder %s194, %s196
      %p200 = scmp.eq.s32.totalorder %s20, 0
      %p201 = por %p199, %p200
      %p202 = scmp.ne.s32.totalorder %s194, %s196
      %p203 = scmp.eq.s32.totalorder %s25, 1
      %p204 = por %p202, %p203
      %p205 = scmp.ne.s32.totalorder %s196, %s197
      %p206 = scmp.eq.s32.totalorder %s25, 0
      %p207 = por %p205, %p206
      %p208 = scmp.ne.s32.totalorder %s196, %s197
      %p209 = scmp.eq.s32.totalorder %s26, 1
      %p210 = por %p208, %p209
      %p212 = scmp.ne.s32.totalorder %s197, %s211
      %p213 = scmp.eq.s32.totalorder %s26, 0
      %p214 = por %p212, %p213
      %s216 = sadd.s32 %s215, 1
      %p219 = scmp.eq.s32.totalorder %s20, 1
      %p220 = scmp.ne.s32.totalorder %s215, %s217
      %p221 = scmp.eq.s32.totalorder %s20, 0
      %p222 = por %p220, %p221
      %p223 = scmp.ne.s32.totalorder %s215, %s217
      %p224 = scmp.eq.s32.totalorder %s25, 1
      %p225 = por %p223, %p224
      %p226 = scmp.ne.s32.totalorder %s217, %s218
      %p227 = scmp.eq.s32.totalorder %s25, 0
      %p228 = por %p226, %p227
      %p229 = scmp.ne.s32.totalorder %s217, %s218
      %p230 = scmp.eq.s32.totalorder %s26, 1
      %p231 = por %p229, %p230
      %p233 = scmp.ne.s32.totalorder %s218, %s232
      %p234 = scmp.eq.s32.totalorder %s26, 0
      %p235 = por %p233, %p234
      %s237 = sadd.s32 %s236, 1
      %p240 = scmp.eq.s32.totalorder %s20, 1
      %p241 = scmp.ne.s32.totalorder %s236, %s238
      %p242 = scmp.eq.s32.totalorder %s20, 0
      %p243 = por %p241, %p242
      %p244 = scmp.ne.s32.totalorder %s236, %s238
      %p245 = scmp.eq.s32.totalorder %s25, 1
      %p246 = por %p244, %p245
      %p247 = scmp.ne.s32.totalorder %s238, %s239
      %p248 = scmp.eq.s32.totalorder %s25, 0
      %p249 = por %p247, %p248
      %p250 = scmp.ne.s32.totalorder %s238, %s239
      %p251 = scmp.eq.s32.totalorder %s26, 1
      %p252 = por %p250, %p251
      %p254 = scmp.ne.s32.totalorder %s239, %s253
      %p255 = scmp.eq.s32.totalorder %s26, 0
      %p256 = por %p254, %p255
      %s258 = sadd.s32 %s257, 1
      %p261 = scmp.eq.s32.totalorder %s20, 1
      %p262 = scmp.ne.s32.totalorder %s257, %s259
      %p263 = scmp.eq.s32.totalorder %s20, 0
      %p264 = por %p262, %p263
      %p265 = scmp.ne.s32.totalorder %s257, %s259
      %p266 = scmp.eq.s32.totalorder %s25, 1
      %p267 = por %p265, %p266
      %p268 = scmp.ne.s32.totalorder %s259, %s260
      %p269 = scmp.eq.s32.totalorder %s25, 0
      %p270 = por %p268, %p269
      %p271 = scmp.ne.s32.totalorder %s259, %s260
      %p272 = scmp.eq.s32.totalorder %s26, 1
      %p273 = por %p271, %p272
      %p275 = scmp.ne.s32.totalorder %s260, %s274
      %p276 = scmp.eq.s32.totalorder %s26, 0
      %p277 = por %p275, %p276
      %s279 = sadd.s32 %s278, 1
      %p282 = scmp.eq.s32.totalorder %s20, 1
      %p283 = scmp.ne.s32.totalorder %s278, %s280
      %p284 = scmp.eq.s32.totalorder %s20, 0
      %p285 = por %p283, %p284
      %p286 = scmp.ne.s32.totalorder %s278, %s280
      %p287 = scmp.eq.s32.totalorder %s25, 1
      %p288 = por %p286, %p287
      %p289 = scmp.ne.s32.totalorder %s280, %s281
      %p290 = scmp.eq.s32.totalorder %s25, 0
      %p291 = por %p289, %p290
      %p292 = scmp.ne.s32.totalorder %s280, %s281
      %p293 = scmp.eq.s32.totalorder %s26, 1
      %p294 = por %p292, %p293
      %p296 = scmp.ne.s32.totalorder %s281, %s295
      %p297 = scmp.eq.s32.totalorder %s26, 0
      %p298 = por %p296, %p297
      %s299 = ssub.s32 %s27, %s46
      %s300 = ssub.s32 %s28, %s42
      %s301 = sor.u32 %s299, %s300
      %p302 = scmp.eq.s32.totalorder %s301, 0
      %s304 = sadd.s32 %s303, 1
      %s305 = scalar_select %p302, %s303, %s304
      %p308 = pneg %p302
      %p309 = scmp.eq.s32.totalorder %s20, 1
      %p310 = por %p308, %p309
      %p311 = scmp.ne.s32.totalorder %s303, %s306
      %p312 = scmp.eq.s32.totalorder %s20, 0
      %p313 = por %p311, %p312
      %p314 = scmp.ne.s32.totalorder %s303, %s306
      %p315 = scmp.eq.s32.totalorder %s25, 1
      %p316 = por %p314, %p315
      %p317 = scmp.ne.s32.totalorder %s306, %s307
      %p318 = scmp.eq.s32.totalorder %s25, 0
      %p319 = por %p317, %p318
      %p320 = scmp.ne.s32.totalorder %s306, %s307
      %p321 = scmp.eq.s32.totalorder %s26, 1
      %p322 = por %p320, %p321
      %p324 = scmp.ne.s32.totalorder %s307, %s323
      %p325 = scmp.eq.s32.totalorder %s26, 0
      %p326 = por %p324, %p325
      %p327 = scmp.le.s32.totalorder 1, %s20
      %p328 = scmp.lt.s32.totalorder %s20, 3
      %p329 = pnand %p327, %p328
      %p330 = pneg %p329
      // Predicated region
      $region9: #{tpu_custom_call.1} parent=5 // pred_check
        _
      $region10: #{tpu_custom_call.1} parent=5 // pred_check_branch
        %332 = sbr.rel (%p329) target = $region12
      $region11: #{tpu_custom_call.1} parent=5 // pred_region
        %s333 = ssub.s32 %s20, 1
        // Predicated region
        $region13: #{tpu_custom_call.1} parent=11 // pred_check
          %p334 = pneg %p144
        $region14: #{tpu_custom_call.1} parent=11 // pred_check_branch
          %336 = sbr.rel (%p334) target = $region16
        $region15: #{tpu_custom_call.1} parent=11 // pred_region
          _
        $region16: #{tpu_custom_call.1} parent=11 // pred_fallthru
          _
        // Predicated region
        $region17: #{tpu_custom_call.1} parent=11 // pred_check
          %p337 = pneg %p165
        $region18: #{tpu_custom_call.1} parent=11 // pred_check_branch
          %339 = sbr.rel (%p337) target = $region20
        $region19: #{tpu_custom_call.1} parent=11 // pred_region
          _
        $region20: #{tpu_custom_call.1} parent=11 // pred_fallthru
          _
        // Predicated region
        $region21: #{tpu_custom_call.1} parent=11 // pred_check
          %p340 = pneg %p186
        $region22: #{tpu_custom_call.1} parent=11 // pred_check_branch
          %342 = sbr.rel (%p340) target = $region24
        $region23: #{tpu_custom_call.1} parent=11 // pred_region
          _
        $region24: #{tpu_custom_call.1} parent=11 // pred_fallthru
          _
        // Predicated region
        $region25: #{tpu_custom_call.1} parent=11 // pred_check
          %p343 = pneg %p207
        $region26: #{tpu_custom_call.1} parent=11 // pred_check_branch
          %345 = sbr.rel (%p343) target = $region28
        $region27: #{tpu_custom_call.1} parent=11 // pred_region
          _
        $region28: #{tpu_custom_call.1} parent=11 // pred_fallthru
          _
        // Predicated region
        $region29: #{tpu_custom_call.1} parent=11 // pred_check
          %p346 = pneg %p228
        $region30: #{tpu_custom_call.1} parent=11 // pred_check_branch
          %348 = sbr.rel (%p346) target = $region32
        $region31: #{tpu_custom_call.1} parent=11 // pred_region
          _
        $region32: #{tpu_custom_call.1} parent=11 // pred_fallthru
          _
        // Predicated region
        $region33: #{tpu_custom_call.1} parent=11 // pred_check
          %p349 = pneg %p249
        $region34: #{tpu_custom_call.1} parent=11 // pred_check_branch
          %351 = sbr.rel (%p349) target = $region36
        $region35: #{tpu_custom_call.1} parent=11 // pred_region
          _
        $region36: #{tpu_custom_call.1} parent=11 // pred_fallthru
          _
        // Predicated region
        $region37: #{tpu_custom_call.1} parent=11 // pred_check
          %p352 = pneg %p270
        $region38: #{tpu_custom_call.1} parent=11 // pred_check_branch
          %354 = sbr.rel (%p352) target = $region40
        $region39: #{tpu_custom_call.1} parent=11 // pred_region
          _
        $region40: #{tpu_custom_call.1} parent=11 // pred_fallthru
          _
        // Predicated region
        $region41: #{tpu_custom_call.1} parent=11 // pred_check
          %p355 = pneg %p291
        $region42: #{tpu_custom_call.1} parent=11 // pred_check_branch
          %357 = sbr.rel (%p355) target = $region44
        $region43: #{tpu_custom_call.1} parent=11 // pred_region
          _
        $region44: #{tpu_custom_call.1} parent=11 // pred_fallthru
          _
      $region12: #{tpu_custom_call.1} parent=5 // pred_fallthru
        _
      %p358 = scmp.lt.s32.totalorder %s20, 2
      // Predicated region
      $region45: #{tpu_custom_call.1} parent=5 // pred_check
        %p359 = pneg %p358
      $region46: #{tpu_custom_call.1} parent=5 // pred_check_branch
        %361 = sbr.rel (%p359) target = $region48
      $region47: #{tpu_custom_call.1} parent=5 // pred_region
        // Predicated region
        $region49: #{tpu_custom_call.1} parent=47 // pred_check
          %p362 = pneg %p61
        $region50: #{tpu_custom_call.1} parent=47 // pred_check_branch
          %364 = sbr.rel (%p362) target = $region52
        $region51: #{tpu_custom_call.1} parent=47 // pred_region
          %p365 = scmp.lt.s32.totalorder %s27, 1
          %s366 = scalar_select %p365, %s27, 1
          %p367 = scmp.lt.s32.totalorder %s28, 0
          %s368 = scalar_select %p367, %s28, 0
          %s369 = sadd.s32 %s368, %s366
          %s370 = smul.addr %s369, 4
          %s371 = scalar_lea.vmem %s0, %s370
        $region52: #{tpu_custom_call.1} parent=47 // pred_fallthru
          _
        // Predicated region
        $region53: #{tpu_custom_call.1} parent=47 // pred_check
          %p372 = pneg %p89
        $region54: #{tpu_custom_call.1} parent=47 // pred_check_branch
          %374 = sbr.rel (%p372) target = $region56
        $region55: #{tpu_custom_call.1} parent=47 // pred_region
          %p375 = scmp.lt.s32.totalorder %s27, 1
          %s376 = scalar_select %p375, %s27, 1
          %p377 = scmp.lt.s32.totalorder %s29, 0
          %s378 = scalar_select %p377, %s29, 0
          %s379 = sadd.s32 %s378, %s376
          %s380 = smul.addr %s379, 4
          %s381 = scalar_lea.vmem %s1, %s380
        $region56: #{tpu_custom_call.1} parent=47 // pred_fallthru
          _
        // Predicated region
        $region57: #{tpu_custom_call.1} parent=47 // pred_check
          %p382 = pneg %p117
        $region58: #{tpu_custom_call.1} parent=47 // pred_check_branch
          %384 = sbr.rel (%p382) target = $region60
        $region59: #{tpu_custom_call.1} parent=47 // pred_region
          %p385 = scmp.lt.s32.totalorder %s27, 1
          %s386 = scalar_select %p385, %s27, 1
          %p387 = scmp.lt.s32.totalorder %s29, 0
          %s388 = scalar_select %p387, %s29, 0
          %s389 = sadd.s32 %s388, %s386
          %s390 = smul.addr %s389, 4
          %s391 = scalar_lea.vmem %s2, %s390
        $region60: #{tpu_custom_call.1} parent=47 // pred_fallthru
          _
      $region48: #{tpu_custom_call.1} parent=5 // pred_fallthru
        _
      %p392 = scmp.le.s32.totalorder 1, %s20
      %p393 = scmp.lt.s32.totalorder %s20, 3
      %p394 = pnand %p392, %p393
      %p395 = pneg %p394
      // Predicated region
      $region61: #{tpu_custom_call.1} parent=5 // pred_check
        _
      $region62: #{tpu_custom_call.1} parent=5 // pred_check_branch
        %397 = sbr.rel (%p394) target = $region64
      $region63: #{tpu_custom_call.1} parent=5 // pred_region
        %s398 = ssub.s32 %s20, 1
        %p399 = scmp.lt.s32.totalorder %s30, 1
        %s400 = scalar_select %p399, %s30, 1
        %p401 = scmp.lt.s32.totalorder %s31, 0
        %s402 = scalar_select %p401, %s31, 0
        %s403 = sadd.s32 %s402, %s400
        %s404 = smul.addr %s403, 4
        %s405 = scalar_lea.vmem %s0, %s404
        %p406 = pneg %p67
        %p407 = pneg %p64
        %p408 = scmp.lt.s32.totalorder %s30, 1
        %s409 = scalar_select %p408, %s30, 1
        %p410 = scmp.lt.s32.totalorder %s32, 0
        %s411 = scalar_select %p410, %s32, 0
        %s412 = sadd.s32 %s411, %s409
        %s413 = smul.addr %s412, 4
        %s414 = scalar_lea.vmem %s1, %s413
        %p415 = pneg %p95
        %p416 = pneg %p92
        %p417 = scmp.lt.s32.totalorder %s30, 1
        %s418 = scalar_select %p417, %s30, 1
        %p419 = scmp.lt.s32.totalorder %s32, 0
        %s420 = scalar_select %p419, %s32, 0
        %s421 = sadd.s32 %s420, %s418
        %s422 = smul.addr %s421, 4
        %s423 = scalar_lea.vmem %s2, %s422
        %p424 = pneg %p123
        %p425 = pneg %p120
        %p426 = pneg %p144
        %p427 = pneg %p141
        %p428 = pneg %p165
        %p429 = pneg %p162
        %p430 = pneg %p186
        %p431 = pneg %p183
        %p432 = pneg %p207
        %p433 = pneg %p204
        %p434 = pneg %p228
        %p435 = pneg %p225
        %p436 = pneg %p249
        %p437 = pneg %p246
        %p438 = pneg %p270
        %p439 = pneg %p267
        %p440 = pneg %p291
        %p441 = pneg %p288
        %p442 = pneg %p319
        %p443 = pneg %p316
        %s444 = sand.u32 %s306, 1
        %s445 = scalar_lea.sflag [#allocation7], %s444
        %s446 = sand.u32 %s306, 1
        %s447 = smul.addr %s446, 8
        %s448 = scalar_lea.vmem [#allocation6], %s447
        %p449 = scmp.lt.s32.totalorder %s30, 1
        %s450 = scalar_select %p449, %s30, 1
        %p451 = scmp.lt.s32.totalorder %s31, 0
        %s452 = scalar_select %p451, %s31, 0
        %s453 = sadd.s32 %s452, %s450
        %s454 = smul.addr %s453, 4
        %s455 = scalar_lea.vmem %s0, %s454
        %p456 = scmp.lt.s32.totalorder %s30, 1
        %s457 = scalar_select %p456, %s30, 1
        %p458 = scmp.lt.s32.totalorder %s32, 0
        %s459 = scalar_select %p458, %s32, 0
        %s460 = sadd.s32 %s459, %s457
        %s461 = smul.addr %s460, 4
        %s462 = scalar_lea.vmem %s1, %s461
        %p463 = scmp.lt.s32.totalorder %s30, 1
        %s464 = scalar_select %p463, %s30, 1
        %p465 = scmp.lt.s32.totalorder %s32, 0
        %s466 = scalar_select %p465, %s32, 0
        %s467 = sadd.s32 %s466, %s464
        %s468 = smul.addr %s467, 4
        %s469 = scalar_lea.vmem %s2, %s468
        %p471 = scmp.eq.s32.totalorder %s32, 0
        // Predicated region
        $region65: #{tpu_custom_call.1} parent=63 // pred_check
          %p472 = pneg %p471
        $region66: #{tpu_custom_call.1} parent=63 // pred_check_branch
          %474 = sbr.rel (%p472) target = $region68
        $region67: #{tpu_custom_call.1} parent=63 // pred_region
          %v475 = vld [vmem:[%s455] sm:$0xf]
          %v476 = vld [vmem:[%s3] sm:$0xf]
          %v477 = vld [vmem:[%s3 + $0x4] sm:$0xf]
          %v478 = vld [vmem:[%s3 + $0x8] sm:$0xf]
          %v479 = vld [vmem:[%s3 + $0xc] sm:$0xf]
          %v480 = vld [vmem:[%s4] sm:$0x1]
          %v482 = vlaneseq
          %v483 = vshrl.u32 %v482, 7
          %v484 = vsub.s32 0, %v483
          %v485 = vrot.slane %v480, %v484
          %v491 = vunpack.c.l.b16 %v476
          %v492 = vunpack.c.l.b16 %v477
          %v493 = vunpack.c.l.b16 %v478
          %v494 = vunpack.c.l.b16 %v479
          %v495 = vpack.c.b16 %v492, %v491
          %v496 = vpack.c.b16 %v494, %v493
          %vm499 = vcmask 261120
          %v501 = vsel %vm499, %v475, 0
          %503 = vmatprep.subr.bf16.mxu0 0
          %504 = vmatpush1.bf16.msra.mxu0 0
          %505 = vmatprep.subr.bf16.mxu0 0
          %506 = vmatpush1.bf16.msra.mxu0 0
          %507 = vmatprep.subr.bf16.mxu0 0
          %508 = vmatpush1.bf16.msra.mxu0 0
          %509 = vmatprep.subr.bf16.mxu0 0
          %510 = vmatpush1.bf16.msra.mxu0 0
          %511 = vmatprep.subr.bf16.mxu0 0
          %512 = vmatpush1.bf16.msra.mxu0 0
          %513 = vmatprep.subr.bf16.mxu0 0
          %514 = vmatpush1.bf16.msra.mxu0 0
          %515 = vmatprep.subr.bf16.mxu0 0
          %516 = vmatpush1.bf16.msra.mxu0 %v496
          %517 = vmatprep.subr.bf16.mxu0 0
          %518 = vmatpush1.bf16.msra.mxu0 %v495
          %519 = vmatprep.subr.bf16.mxu0 0
          %520 = vmatpush2.bf16.msra.mxu0 0
          %521 = vmatprep.subr.bf16.mxu0 0
          %522 = vmatpush2.bf16.msra.mxu0 0
          %523 = vmatprep.subr.bf16.mxu0 0
          %524 = vmatpush2.bf16.msra.mxu0 0
          %525 = vmatprep.subr.bf16.mxu0 0
          %526 = vmatpush2.bf16.msra.mxu0 0
          %527 = vmatprep.subr.bf16.mxu0 0
          %528 = vmatpush2.bf16.msra.mxu0 0
          %529 = vmatprep.subr.bf16.mxu0 0
          %530 = vmatpush2.bf16.msra.mxu0 0
          %531 = vmatprep.subr.bf16.mxu0 0
          %532 = vmatpush2.bf16.msra.mxu0 0
          %533 = vmatprep.subr.bf16.mxu0 0
          %534 = vmatpush2.bf16.msra.mxu0 0
          %535 = vmatprep.mubr.bf16.mxu0 0
          %536 = vmatmul.mubr.bf16.gmra.mxu0 %v501
          %v537 = vpop.f32.mrf.mxu0
          %v538 = vadd.f32 %v485, %v537
          %v539 = vpop.f32.mrf.mxu0
          %v540 = vpop.f32.mrf.mxu0
          %v541 = vpop.f32.mrf.mxu0
          %542 = vdwg.mxu0
          %v543 = vpack.c.bf16 %v538, %v538
          %vm544 = vcmask 60416
          %545 = vst.msk [vmem:[#allocation2] sm:$0xf] %vm544, %v543
          %s546 = scalar_lea.vmem %s3, 16
          %v547 = vld [vmem:[%s546] sm:$0xf]
          %v548 = vld [vmem:[%s546 + $0x4] sm:$0xf]
          %v549 = vld [vmem:[%s546 + $0x8] sm:$0xf]
          %v550 = vld [vmem:[%s546 + $0xc] sm:$0xf]
          %s551 = scalar_lea.vmem %s4, 1
          %v552 = vld [vmem:[%s551] sm:$0x1]
          %v554 = vlaneseq
          %v555 = vshrl.u32 %v554, 7
          %v556 = vsub.s32 0, %v555
          %v557 = vrot.slane %v552, %v556
          %v563 = vunpack.c.l.b16 %v547
          %v564 = vunpack.c.l.b16 %v548
          %v565 = vunpack.c.l.b16 %v549
          %v566 = vunpack.c.l.b16 %v550
          %v567 = vpack.c.b16 %v564, %v563
          %v568 = vpack.c.b16 %v566, %v565
          %571 = vmatprep.subr.bf16.mxu0 0
          %572 = vmatpush1.bf16.msra.mxu0 0
          %573 = vmatprep.subr.bf16.mxu0 0
          %574 = vmatpush1.bf16.msra.mxu0 0
          %575 = vmatprep.subr.bf16.mxu0 0
          %576 = vmatpush1.bf16.msra.mxu0 0
          %577 = vmatprep.subr.bf16.mxu0 0
          %578 = vmatpush1.bf16.msra.mxu0 0
          %579 = vmatprep.subr.bf16.mxu0 0
          %580 = vmatpush1.bf16.msra.mxu0 0
          %581 = vmatprep.subr.bf16.mxu0 0
          %582 = vmatpush1.bf16.msra.mxu0 0
          %583 = vmatprep.subr.bf16.mxu0 0
          %584 = vmatpush1.bf16.msra.mxu0 %v568
          %585 = vmatprep.subr.bf16.mxu0 0
          %586 = vmatpush1.bf16.msra.mxu0 %v567
          %587 = vmatprep.subr.bf16.mxu0 0
          %588 = vmatpush2.bf16.msra.mxu0 0
          %589 = vmatprep.subr.bf16.mxu0 0
          %590 = vmatpush2.bf16.msra.mxu0 0
          %591 = vmatprep.subr.bf16.mxu0 0
          %592 = vmatpush2.bf16.msra.mxu0 0
          %593 = vmatprep.subr.bf16.mxu0 0
          %594 = vmatpush2.bf16.msra.mxu0 0
          %595 = vmatprep.subr.bf16.mxu0 0
          %596 = vmatpush2.bf16.msra.mxu0 0
          %597 = vmatprep.subr.bf16.mxu0 0
          %598 = vmatpush2.bf16.msra.mxu0 0
          %599 = vmatprep.subr.bf16.mxu0 0
          %600 = vmatpush2.bf16.msra.mxu0 0
          %601 = vmatprep.subr.bf16.mxu0 0
          %602 = vmatpush2.bf16.msra.mxu0 0
          %603 = vmatprep.mubr.bf16.mxu0 0
          %604 = vmatmul.mubr.bf16.gmra.mxu0 %v501
          %v605 = vpop.f32.mrf.mxu0
          %v606 = vadd.f32 %v557, %v605
          %v607 = vpop.f32.mrf.mxu0
          %v608 = vpop.f32.mrf.mxu0
          %v609 = vpop.f32.mrf.mxu0
          %610 = vdwg.mxu0
          %v611 = vpack.c.bf16 %v606, %v606
          %s612 = scalar_lea.vmem [#allocation2], 4
          %613 = vst.msk [vmem:[%s612] sm:$0xf] %vm544, %v611
          %s614 = scalar_lea.vmem %s3, 32
          %v615 = vld [vmem:[%s614] sm:$0xf]
          %v616 = vld [vmem:[%s614 + $0x4] sm:$0xf]
          %v617 = vld [vmem:[%s614 + $0x8] sm:$0xf]
          %v618 = vld [vmem:[%s614 + $0xc] sm:$0xf]
          %s619 = scalar_lea.vmem %s4, 2
          %v620 = vld [vmem:[%s619] sm:$0x1]
          %v622 = vlaneseq
          %v623 = vshrl.u32 %v622, 7
          %v624 = vsub.s32 0, %v623
          %v625 = vrot.slane %v620, %v624
          %v631 = vunpack.c.l.b16 %v615
          %v632 = vunpack.c.l.b16 %v616
          %v633 = vunpack.c.l.b16 %v617
          %v634 = vunpack.c.l.b16 %v618
          %v635 = vpack.c.b16 %v632, %v631
          %v636 = vpack.c.b16 %v634, %v633
          %639 = vmatprep.subr.bf16.mxu0 0
          %640 = vmatpush1.bf16.msra.mxu0 0
          %641 = vmatprep.subr.bf16.mxu0 0
          %642 = vmatpush1.bf16.msra.mxu0 0
          %643 = vmatprep.subr.bf16.mxu0 0
          %644 = vmatpush1.bf16.msra.mxu0 0
          %645 = vmatprep.subr.bf16.mxu0 0
          %646 = vmatpush1.bf16.msra.mxu0 0
          %647 = vmatprep.subr.bf16.mxu0 0
          %648 = vmatpush1.bf16.msra.mxu0 0
          %649 = vmatprep.subr.bf16.mxu0 0
          %650 = vmatpush1.bf16.msra.mxu0 0
          %651 = vmatprep.subr.bf16.mxu0 0
          %652 = vmatpush1.bf16.msra.mxu0 %v636
          %653 = vmatprep.subr.bf16.mxu0 0
          %654 = vmatpush1.bf16.msra.mxu0 %v635
          %655 = vmatprep.subr.bf16.mxu0 0
          %656 = vmatpush2.bf16.msra.mxu0 0
          %657 = vmatprep.subr.bf16.mxu0 0
          %658 = vmatpush2.bf16.msra.mxu0 0
          %659 = vmatprep.subr.bf16.mxu0 0
          %660 = vmatpush2.bf16.msra.mxu0 0
          %661 = vmatprep.subr.bf16.mxu0 0
          %662 = vmatpush2.bf16.msra.mxu0 0
          %663 = vmatprep.subr.bf16.mxu0 0
          %664 = vmatpush2.bf16.msra.mxu0 0
          %665 = vmatprep.subr.bf16.mxu0 0
          %666 = vmatpush2.bf16.msra.mxu0 0
          %667 = vmatprep.subr.bf16.mxu0 0
          %668 = vmatpush2.bf16.msra.mxu0 0
          %669 = vmatprep.subr.bf16.mxu0 0
          %670 = vmatpush2.bf16.msra.mxu0 0
          %671 = vmatprep.mubr.bf16.mxu0 0
          %672 = vmatmul.mubr.bf16.gmra.mxu0 %v501
          %v673 = vpop.f32.mrf.mxu0
          %v674 = vadd.f32 %v625, %v673
          %v675 = vpop.f32.mrf.mxu0
          %v676 = vpop.f32.mrf.mxu0
          %v677 = vpop.f32.mrf.mxu0
          %678 = vdwg.mxu0
          %v679 = vpack.c.bf16 %v674, %v674
          %s680 = scalar_lea.vmem [#allocation2], 8
          %681 = vst.msk [vmem:[%s680] sm:$0xf] %vm544, %v679
          %s682 = scalar_lea.vmem %s3, 48
          %v683 = vld [vmem:[%s682] sm:$0xf]
          %v684 = vld [vmem:[%s682 + $0x4] sm:$0xf]
          %v685 = vld [vmem:[%s682 + $0x8] sm:$0xf]
          %v686 = vld [vmem:[%s682 + $0xc] sm:$0xf]
          %s687 = scalar_lea.vmem %s4, 3
          %v688 = vld [vmem:[%s687] sm:$0x1]
          %v690 = vlaneseq
          %v691 = vshrl.u32 %v690, 7
          %v692 = vsub.s32 0, %v691
          %v693 = vrot.slane %v688, %v692
          %v699 = vunpack.c.l.b16 %v683
          %v700 = vunpack.c.l.b16 %v684
          %v701 = vunpack.c.l.b16 %v685
          %v702 = vunpack.c.l.b16 %v686
          %v703 = vpack.c.b16 %v700, %v699
          %v704 = vpack.c.b16 %v702, %v701
          %707 = vmatprep.subr.bf16.mxu0 0
          %708 = vmatpush1.bf16.msra.mxu0 0
          %709 = vmatprep.subr.bf16.mxu0 0
          %710 = vmatpush1.bf16.msra.mxu0 0
          %711 = vmatprep.subr.bf16.mxu0 0
          %712 = vmatpush1.bf16.msra.mxu0 0
          %713 = vmatprep.subr.bf16.mxu0 0
          %714 = vmatpush1.bf16.msra.mxu0 0
          %715 = vmatprep.subr.bf16.mxu0 0
          %716 = vmatpush1.bf16.msra.mxu0 0
          %717 = vmatprep.subr.bf16.mxu0 0
          %718 = vmatpush1.bf16.msra.mxu0 0
          %719 = vmatprep.subr.bf16.mxu0 0
          %720 = vmatpush1.bf16.msra.mxu0 %v704
          %721 = vmatprep.subr.bf16.mxu0 0
          %722 = vmatpush1.bf16.msra.mxu0 %v703
          %723 = vmatprep.subr.bf16.mxu0 0
          %724 = vmatpush2.bf16.msra.mxu0 0
          %725 = vmatprep.subr.bf16.mxu0 0
          %726 = vmatpush2.bf16.msra.mxu0 0
          %727 = vmatprep.subr.bf16.mxu0 0
          %728 = vmatpush2.bf16.msra.mxu0 0
          %729 = vmatprep.subr.bf16.mxu0 0
          %730 = vmatpush2.bf16.msra.mxu0 0
          %731 = vmatprep.subr.bf16.mxu0 0
          %732 = vmatpush2.bf16.msra.mxu0 0
          %733 = vmatprep.subr.bf16.mxu0 0
          %734 = vmatpush2.bf16.msra.mxu0 0
          %735 = vmatprep.subr.bf16.mxu0 0
          %736 = vmatpush2.bf16.msra.mxu0 0
          %737 = vmatprep.subr.bf16.mxu0 0
          %738 = vmatpush2.bf16.msra.mxu0 0
          %739 = vmatprep.mubr.bf16.mxu0 0
          %740 = vmatmul.mubr.bf16.gmra.mxu0 %v501
          %v741 = vpop.f32.mrf.mxu0
          %v742 = vadd.f32 %v693, %v741
          %v743 = vpop.f32.mrf.mxu0
          %v744 = vpop.f32.mrf.mxu0
          %v745 = vpop.f32.mrf.mxu0
          %746 = vdwg.mxu0
          %v747 = vpack.c.bf16 %v742, %v742
          %s748 = scalar_lea.vmem [#allocation2], 12
          %749 = vst.msk [vmem:[%s748] sm:$0xf] %vm544, %v747
          %vm750 = vcmask 7168
          %751 = vst.msk [vmem:[#allocation3] sm:$0xff] %vm750, -inf
          %752 = vst.msk [vmem:[#allocation3 + $0x8] sm:$0xff] %vm750, -inf
          %753 = vst.msk [vmem:[#allocation3 + $0x10] sm:$0xff] %vm750, -inf
          %754 = vst.msk [vmem:[#allocation3 + $0x18] sm:$0xff] %vm750, -inf
          %755 = vst.msk [vmem:[#allocation4] sm:$0xff] %vm750, 0.0
          %756 = vst.msk [vmem:[#allocation4 + $0x8] sm:$0xff] %vm750, 0.0
          %757 = vst.msk [vmem:[#allocation4 + $0x10] sm:$0xff] %vm750, 0.0
          %758 = vst.msk [vmem:[#allocation4 + $0x18] sm:$0xff] %vm750, 0.0
          %vm759 = vcmask 64512
          %760 = vst.msk [vmem:[#allocation5] sm:$0xff] %vm759, 0.0
          %761 = vst.msk [vmem:[#allocation5 + $0x8] sm:$0xff] %vm759, 0.0
          %762 = vst.msk [vmem:[#allocation5 + $0x10] sm:$0xff] %vm759, 0.0
          %763 = vst.msk [vmem:[#allocation5 + $0x18] sm:$0xff] %vm759, 0.0
        $region68: #{tpu_custom_call.1} parent=63 // pred_fallthru
          _
        %v764 = vld [vmem:[%s462] sm:$0xf]
        %v765 = vld [vmem:[%s469] sm:$0xf]
        %v766 = vld [vmem:[%s5] sm:$0xf]
        %v767 = vld [vmem:[%s5 + $0x4] sm:$0xf]
        %v768 = vld [vmem:[%s5 + $0x8] sm:$0xf]
        %v769 = vld [vmem:[%s5 + $0xc] sm:$0xf]
        %v770 = vld [vmem:[%s6] sm:$0x1]
        %v772 = vlaneseq
        %v773 = vshrl.u32 %v772, 7
        %v774 = vsub.s32 0, %v773
        %v775 = vrot.slane %v770, %v774
        %v781 = vunpack.c.l.b16 %v766
        %v782 = vunpack.c.l.b16 %v767
        %v783 = vunpack.c.l.b16 %v768
        %v784 = vunpack.c.l.b16 %v769
        %v785 = vpack.c.b16 %v782, %v781
        %v786 = vpack.c.b16 %v784, %v783
        %vm789 = vcmask 261120
        %v791 = vsel %vm789, %v764, 0
        %793 = vmatprep.subr.bf16.mxu0 0
        %794 = vmatpush1.bf16.msra.mxu0 0
        %795 = vmatprep.subr.bf16.mxu0 0
        %796 = vmatpush1.bf16.msra.mxu0 0
        %797 = vmatprep.subr.bf16.mxu0 0
        %798 = vmatpush1.bf16.msra.mxu0 0
        %799 = vmatprep.subr.bf16.mxu0 0
        %800 = vmatpush1.bf16.msra.mxu0 0
        %801 = vmatprep.subr.bf16.mxu0 0
        %802 = vmatpush1.bf16.msra.mxu0 0
        %803 = vmatprep.subr.bf16.mxu0 0
        %804 = vmatpush1.bf16.msra.mxu0 0
        %805 = vmatprep.subr.bf16.mxu0 0
        %806 = vmatpush1.bf16.msra.mxu0 %v786
        %807 = vmatprep.subr.bf16.mxu0 0
        %808 = vmatpush1.bf16.msra.mxu0 %v785
        %809 = vmatprep.subr.bf16.mxu0 0
        %810 = vmatpush2.bf16.msra.mxu0 0
        %811 = vmatprep.subr.bf16.mxu0 0
        %812 = vmatpush2.bf16.msra.mxu0 0
        %813 = vmatprep.subr.bf16.mxu0 0
        %814 = vmatpush2.bf16.msra.mxu0 0
        %815 = vmatprep.subr.bf16.mxu0 0
        %816 = vmatpush2.bf16.msra.mxu0 0
        %817 = vmatprep.subr.bf16.mxu0 0
        %818 = vmatpush2.bf16.msra.mxu0 0
        %819 = vmatprep.subr.bf16.mxu0 0
        %820 = vmatpush2.bf16.msra.mxu0 0
        %821 = vmatprep.subr.bf16.mxu0 0
        %822 = vmatpush2.bf16.msra.mxu0 0
        %823 = vmatprep.subr.bf16.mxu0 0
        %824 = vmatpush2.bf16.msra.mxu0 0
        %825 = vmatprep.mubr.bf16.mxu0 0
        %826 = vmatmul.mubr.bf16.gmra.mxu0 %v791
        %v827 = vpop.f32.mrf.mxu0
        %v828 = vadd.f32 %v775, %v827
        %v829 = vpop.f32.mrf.mxu0
        %v830 = vpop.f32.mrf.mxu0
        %v831 = vpop.f32.mrf.mxu0
        %832 = vdwg.mxu0
        %v833 = vpack.c.bf16 %v828, %v828
        %v834 = vld [vmem:[%s7] sm:$0xf]
        %v835 = vld [vmem:[%s7 + $0x4] sm:$0xf]
        %v836 = vld [vmem:[%s7 + $0x8] sm:$0xf]
        %v837 = vld [vmem:[%s7 + $0xc] sm:$0xf]
        %v838 = vld [vmem:[%s8] sm:$0x1]
        %v840 = vlaneseq
        %v841 = vshrl.u32 %v840, 7
        %v842 = vsub.s32 0, %v841
        %v843 = vrot.slane %v838, %v842
        %v849 = vunpack.c.l.b16 %v834
        %v850 = vunpack.c.l.b16 %v835
        %v851 = vunpack.c.l.b16 %v836
        %v852 = vunpack.c.l.b16 %v837
        %v853 = vpack.c.b16 %v850, %v849
        %v854 = vpack.c.b16 %v852, %v851
        %v858 = vsel %vm789, %v765, 0
        %860 = vmatprep.subr.bf16.mxu0 0
        %861 = vmatpush1.bf16.msra.mxu0 0
        %862 = vmatprep.subr.bf16.mxu0 0
        %863 = vmatpush1.bf16.msra.mxu0 0
        %864 = vmatprep.subr.bf16.mxu0 0
        %865 = vmatpush1.bf16.msra.mxu0 0
        %866 = vmatprep.subr.bf16.mxu0 0
        %867 = vmatpush1.bf16.msra.mxu0 0
        %868 = vmatprep.subr.bf16.mxu0 0
        %869 = vmatpush1.bf16.msra.mxu0 0
        %870 = vmatprep.subr.bf16.mxu0 0
        %871 = vmatpush1.bf16.msra.mxu0 0
        %872 = vmatprep.subr.bf16.mxu0 0
        %873 = vmatpush1.bf16.msra.mxu0 %v854
        %874 = vmatprep.subr.bf16.mxu0 0
        %875 = vmatpush1.bf16.msra.mxu0 %v853
        %876 = vmatprep.subr.bf16.mxu0 0
        %877 = vmatpush2.bf16.msra.mxu0 0
        %878 = vmatprep.subr.bf16.mxu0 0
        %879 = vmatpush2.bf16.msra.mxu0 0
        %880 = vmatprep.subr.bf16.mxu0 0
        %881 = vmatpush2.bf16.msra.mxu0 0
        %882 = vmatprep.subr.bf16.mxu0 0
        %883 = vmatpush2.bf16.msra.mxu0 0
        %884 = vmatprep.subr.bf16.mxu0 0
        %885 = vmatpush2.bf16.msra.mxu0 0
        %886 = vmatprep.subr.bf16.mxu0 0
        %887 = vmatpush2.bf16.msra.mxu0 0
        %888 = vmatprep.subr.bf16.mxu0 0
        %889 = vmatpush2.bf16.msra.mxu0 0
        %890 = vmatprep.subr.bf16.mxu0 0
        %891 = vmatpush2.bf16.msra.mxu0 0
        %892 = vmatprep.mubr.bf16.mxu0 0
        %893 = vmatmul.mubr.bf16.gmra.mxu0 %v858
        %v894 = vpop.f32.mrf.mxu0
        %v895 = vadd.f32 %v843, %v894
        %v896 = vpop.f32.mrf.mxu0
        %v897 = vpop.f32.mrf.mxu0
        %v898 = vpop.f32.mrf.mxu0
        %899 = vdwg.mxu0
        %v900 = vpack.c.bf16 %v895, %v895
        %v901 = vld [vmem:[#allocation2] sm:$0xf]
        %vm902 = vcmask 64512
        %v904 = vsel %vm902, %v901, 0
        %v907 = vsel %vm902, %v833, 0
        %909 = vmatprep.subr.bf16.mxu0 0
        %910 = vmatpush1.bf16.xpose.msra.mxu0 0
        %911 = vmatprep.subr.bf16.mxu0 0
        %912 = vmatpush1.bf16.xpose.msra.mxu0 0
        %913 = vmatprep.subr.bf16.mxu0 0
        %914 = vmatpush1.bf16.xpose.msra.mxu0 0
        %915 = vmatprep.subr.bf16.mxu0 0
        %916 = vmatpush1.bf16.xpose.msra.mxu0 0
        %917 = vmatprep.subr.bf16.mxu0 0
        %918 = vmatpush1.bf16.xpose.msra.mxu0 0
        %919 = vmatprep.subr.bf16.mxu0 0
        %920 = vmatpush1.bf16.xpose.msra.mxu0 0
        %921 = vmatprep.subr.bf16.mxu0 0
        %922 = vmatpush1.bf16.xpose.msra.mxu0 0
        %923 = vmatprep.subr.bf16.mxu0 0
        %924 = vmatpush1.bf16.xpose.msra.mxu0 %v907
        %925 = vmatprep.subr.bf16.mxu0 0
        %926 = vmatpush2.bf16.xpose.msra.mxu0 0
        %927 = vmatprep.subr.bf16.mxu0 0
        %928 = vmatpush2.bf16.xpose.msra.mxu0 0
        %929 = vmatprep.subr.bf16.mxu0 0
        %930 = vmatpush2.bf16.xpose.msra.mxu0 0
        %931 = vmatprep.subr.bf16.mxu0 0
        %932 = vmatpush2.bf16.xpose.msra.mxu0 0
        %933 = vmatprep.subr.bf16.mxu0 0
        %934 = vmatpush2.bf16.xpose.msra.mxu0 0
        %935 = vmatprep.subr.bf16.mxu0 0
        %936 = vmatpush2.bf16.xpose.msra.mxu0 0
        %937 = vmatprep.subr.bf16.mxu0 0
        %938 = vmatpush2.bf16.xpose.msra.mxu0 0
        %939 = vmatprep.subr.bf16.mxu0 0
        %940 = vmatpush2.bf16.xpose.msra.mxu0 0
        %941 = vmatprep.mubr.bf16.mxu0 0
        %942 = vmatmul.mubr.bf16.gmra.mxu0 %v904
        %v943 = vpop.f32.mrf.mxu0
        %v944 = vadd.f32 0.0, %v943
        %v945 = vpop.f32.mrf.mxu0
        %v946 = vpop.f32.mrf.mxu0
        %v947 = vpop.f32.mrf.mxu0
        %948 = vdwg.mxu0
        %v949 = vld [vmem:[#allocation3] sm:$0xff]
        %v950 = vsel %vm902, %v944, -inf
        %951 = vmax.xlane.f32.xlu0 %v950
        %v952 = vpop.xlane.xlu0 %951
        %v953 = vmax.f32 %v949, %v952
        %v954 = vsub.f32 %v949, %v953
        %v955 = vmul.f32 %v954, 1.442695
        %v956 = vpow.pop %v955
        %958 = vset.pattern.permute.xlu0 0
        %959 = vperm.xlu0 %958, %v953
        %v960 = vpop.permute.xlu0 %959
        %v962 = vsub.f32 %v944, %v960
        %v963 = vmul.f32 %v962, 1.442695
        %v964 = vpow.pop %v963
        %v965 = vld [vmem:[#allocation4] sm:$0xff]
        %v966 = vmul.f32 %v956, %v965
        %v967 = vsel %vm902, %v964, 0.0
        %968 = vadd.xlane.f32.xlu0 %v967
        %v969 = vpop.xlane.xlu0 %968
        %v970 = vadd.f32 %v966, %v969
        %vm971 = vcmask 7168
        %972 = vst.msk [vmem:[#allocation4] sm:$0xff] %vm971, %v970
        %v973 = vld [vmem:[#allocation5] sm:$0xff]
        %975 = vset.pattern.permute.xlu0 0
        %976 = vperm.xlu0 %975, %v956
        %v977 = vpop.permute.xlu0 %976
        %v979 = vmul.f32 %v977, %v973
        %v980 = vpack.c.bf16 %v964, %v964
        %v982 = vsel %vm902, %v980, 0
        %vm984 = vcmask 1043456
        %v986 = vsel %vm984, %v900, 0
        %988 = vmatprep.subr.bf16.mxu0 0
        %989 = vmatpush1.bf16.msra.mxu0 0
        %990 = vmatprep.subr.bf16.mxu0 0
        %991 = vmatpush1.bf16.msra.mxu0 0
        %992 = vmatprep.subr.bf16.mxu0 0
        %993 = vmatpush1.bf16.msra.mxu0 0
        %994 = vmatprep.subr.bf16.mxu0 0
        %995 = vmatpush1.bf16.msra.mxu0 0
        %996 = vmatprep.subr.bf16.mxu0 0
        %997 = vmatpush1.bf16.msra.mxu0 0
        %998 = vmatprep.subr.bf16.mxu0 0
        %999 = vmatpush1.bf16.msra.mxu0 0
        %1000 = vmatprep.subr.bf16.mxu0 0
        %1001 = vmatpush1.bf16.msra.mxu0 0
        %1002 = vmatprep.subr.bf16.mxu0 0
        %1003 = vmatpush1.bf16.msra.mxu0 %v986
        %1004 = vmatprep.subr.bf16.mxu0 0
        %1005 = vmatpush2.bf16.msra.mxu0 0
        %1006 = vmatprep.subr.bf16.mxu0 0
        %1007 = vmatpush2.bf16.msra.mxu0 0
        %1008 = vmatprep.subr.bf16.mxu0 0
        %1009 = vmatpush2.bf16.msra.mxu0 0
        %1010 = vmatprep.subr.bf16.mxu0 0
        %1011 = vmatpush2.bf16.msra.mxu0 0
        %1012 = vmatprep.subr.bf16.mxu0 0
        %1013 = vmatpush2.bf16.msra.mxu0 0
        %1014 = vmatprep.subr.bf16.mxu0 0
        %1015 = vmatpush2.bf16.msra.mxu0 0
        %1016 = vmatprep.subr.bf16.mxu0 0
        %1017 = vmatpush2.bf16.msra.mxu0 0
        %1018 = vmatprep.subr.bf16.mxu0 0
        %1019 = vmatpush2.bf16.msra.mxu0 0
        %1020 = vmatprep.mubr.bf16.mxu0 0
        %1021 = vmatmul.mubr.bf16.gmra.mxu0 %v982
        %v1022 = vpop.f32.mrf.mxu0
        %v1023 = vadd.f32 0.0, %v1022
        %v1024 = vpop.f32.mrf.mxu0
        %v1025 = vpop.f32.mrf.mxu0
        %v1026 = vpop.f32.mrf.mxu0
        %1027 = vdwg.mxu0
        %v1028 = vadd.f32 %v979, %v1023
        %1029 = vst.msk [vmem:[#allocation5] sm:$0xff] %vm902, %v1028
        %1030 = vst.msk [vmem:[#allocation3] sm:$0xff] %vm971, %v953
        %s1031 = scalar_lea.vmem %s5, 16
        %v1032 = vld [vmem:[%s1031] sm:$0xf]
        %v1033 = vld [vmem:[%s1031 + $0x4] sm:$0xf]
        %v1034 = vld [vmem:[%s1031 + $0x8] sm:$0xf]
        %v1035 = vld [vmem:[%s1031 + $0xc] sm:$0xf]
        %s1036 = scalar_lea.vmem %s6, 1
        %v1037 = vld [vmem:[%s1036] sm:$0x1]
        %v1039 = vlaneseq
        %v1040 = vshrl.u32 %v1039, 7
        %v1041 = vsub.s32 0, %v1040
        %v1042 = vrot.slane %v1037, %v1041
        %v1048 = vunpack.c.l.b16 %v1032
        %v1049 = vunpack.c.l.b16 %v1033
        %v1050 = vunpack.c.l.b16 %v1034
        %v1051 = vunpack.c.l.b16 %v1035
        %v1052 = vpack.c.b16 %v1049, %v1048
        %v1053 = vpack.c.b16 %v1051, %v1050
        %1056 = vmatprep.subr.bf16.mxu0 0
        %1057 = vmatpush1.bf16.msra.mxu0 0
        %1058 = vmatprep.subr.bf16.mxu0 0
        %1059 = vmatpush1.bf16.msra.mxu0 0
        %1060 = vmatprep.subr.bf16.mxu0 0
        %1061 = vmatpush1.bf16.msra.mxu0 0
        %1062 = vmatprep.subr.bf16.mxu0 0
        %1063 = vmatpush1.bf16.msra.mxu0 0
        %1064 = vmatprep.subr.bf16.mxu0 0
        %1065 = vmatpush1.bf16.msra.mxu0 0
        %1066 = vmatprep.subr.bf16.mxu0 0
        %1067 = vmatpush1.bf16.msra.mxu0 0
        %1068 = vmatprep.subr.bf16.mxu0 0
        %1069 = vmatpush1.bf16.msra.mxu0 %v1053
        %1070 = vmatprep.subr.bf16.mxu0 0
        %1071 = vmatpush1.bf16.msra.mxu0 %v1052
        %1072 = vmatprep.subr.bf16.mxu0 0
        %1073 = vmatpush2.bf16.msra.mxu0 0
        %1074 = vmatprep.subr.bf16.mxu0 0
        %1075 = vmatpush2.bf16.msra.mxu0 0
        %1076 = vmatprep.subr.bf16.mxu0 0
        %1077 = vmatpush2.bf16.msra.mxu0 0
        %1078 = vmatprep.subr.bf16.mxu0 0
        %1079 = vmatpush2.bf16.msra.mxu0 0
        %1080 = vmatprep.subr.bf16.mxu0 0
        %1081 = vmatpush2.bf16.msra.mxu0 0
        %1082 = vmatprep.subr.bf16.mxu0 0
        %1083 = vmatpush2.bf16.msra.mxu0 0
        %1084 = vmatprep.subr.bf16.mxu0 0
        %1085 = vmatpush2.bf16.msra.mxu0 0
        %1086 = vmatprep.subr.bf16.mxu0 0
        %1087 = vmatpush2.bf16.msra.mxu0 0
        %1088 = vmatprep.mubr.bf16.mxu0 0
        %1089 = vmatmul.mubr.bf16.gmra.mxu0 %v791
        %v1090 = vpop.f32.mrf.mxu0
        %v1091 = vadd.f32 %v1042, %v1090
        %v1092 = vpop.f32.mrf.mxu0
        %v1093 = vpop.f32.mrf.mxu0
        %v1094 = vpop.f32.mrf.mxu0
        %1095 = vdwg.mxu0
        %v1096 = vpack.c.bf16 %v1091, %v1091
        %s1097 = scalar_lea.vmem %s7, 16
        %v1098 = vld [vmem:[%s1097] sm:$0xf]
        %v1099 = vld [vmem:[%s1097 + $0x4] sm:$0xf]
        %v1100 = vld [vmem:[%s1097 + $0x8] sm:$0xf]
        %v1101 = vld [vmem:[%s1097 + $0xc] sm:$0xf]
        %s1102 = scalar_lea.vmem %s8, 1
        %v1103 = vld [vmem:[%s1102] sm:$0x1]
        %v1105 = vlaneseq
        %v1106 = vshrl.u32 %v1105, 7
        %v1107 = vsub.s32 0, %v1106
        %v1108 = vrot.slane %v1103, %v1107
        %v1114 = vunpack.c.l.b16 %v1098
        %v1115 = vunpack.c.l.b16 %v1099
        %v1116 = vunpack.c.l.b16 %v1100
        %v1117 = vunpack.c.l.b16 %v1101
        %v1118 = vpack.c.b16 %v1115, %v1114
        %v1119 = vpack.c.b16 %v1117, %v1116
        %1122 = vmatprep.subr.bf16.mxu0 0
        %1123 = vmatpush1.bf16.msra.mxu0 0
        %1124 = vmatprep.subr.bf16.mxu0 0
        %1125 = vmatpush1.bf16.msra.mxu0 0
        %1126 = vmatprep.subr.bf16.mxu0 0
        %1127 = vmatpush1.bf16.msra.mxu0 0
        %1128 = vmatprep.subr.bf16.mxu0 0
        %1129 = vmatpush1.bf16.msra.mxu0 0
        %1130 = vmatprep.subr.bf16.mxu0 0
        %1131 = vmatpush1.bf16.msra.mxu0 0
        %1132 = vmatprep.subr.bf16.mxu0 0
        %1133 = vmatpush1.bf16.msra.mxu0 0
        %1134 = vmatprep.subr.bf16.mxu0 0
        %1135 = vmatpush1.bf16.msra.mxu0 %v1119
        %1136 = vmatprep.subr.bf16.mxu0 0
        %1137 = vmatpush1.bf16.msra.mxu0 %v1118
        %1138 = vmatprep.subr.bf16.mxu0 0
        %1139 = vmatpush2.bf16.msra.mxu0 0
        %1140 = vmatprep.subr.bf16.mxu0 0
        %1141 = vmatpush2.bf16.msra.mxu0 0
        %1142 = vmatprep.subr.bf16.mxu0 0
        %1143 = vmatpush2.bf16.msra.mxu0 0
        %1144 = vmatprep.subr.bf16.mxu0 0
        %1145 = vmatpush2.bf16.msra.mxu0 0
        %1146 = vmatprep.subr.bf16.mxu0 0
        %1147 = vmatpush2.bf16.msra.mxu0 0
        %1148 = vmatprep.subr.bf16.mxu0 0
        %1149 = vmatpush2.bf16.msra.mxu0 0
        %1150 = vmatprep.subr.bf16.mxu0 0
        %1151 = vmatpush2.bf16.msra.mxu0 0
        %1152 = vmatprep.subr.bf16.mxu0 0
        %1153 = vmatpush2.bf16.msra.mxu0 0
        %1154 = vmatprep.mubr.bf16.mxu0 0
        %1155 = vmatmul.mubr.bf16.gmra.mxu0 %v858
        %v1156 = vpop.f32.mrf.mxu0
        %v1157 = vadd.f32 %v1108, %v1156
        %v1158 = vpop.f32.mrf.mxu0
        %v1159 = vpop.f32.mrf.mxu0
        %v1160 = vpop.f32.mrf.mxu0
        %1161 = vdwg.mxu0
        %v1162 = vpack.c.bf16 %v1157, %v1157
        %s1163 = scalar_lea.vmem [#allocation2], 4
        %v1164 = vld [vmem:[%s1163] sm:$0xf]
        %v1166 = vsel %vm902, %v1164, 0
        %v1169 = vsel %vm902, %v1096, 0
        %1171 = vmatprep.subr.bf16.mxu0 0
        %1172 = vmatpush1.bf16.xpose.msra.mxu0 0
        %1173 = vmatprep.subr.bf16.mxu0 0
        %1174 = vmatpush1.bf16.xpose.msra.mxu0 0
        %1175 = vmatprep.subr.bf16.mxu0 0
        %1176 = vmatpush1.bf16.xpose.msra.mxu0 0
        %1177 = vmatprep.subr.bf16.mxu0 0
        %1178 = vmatpush1.bf16.xpose.msra.mxu0 0
        %1179 = vmatprep.subr.bf16.mxu0 0
        %1180 = vmatpush1.bf16.xpose.msra.mxu0 0
        %1181 = vmatprep.subr.bf16.mxu0 0
        %1182 = vmatpush1.bf16.xpose.msra.mxu0 0
        %1183 = vmatprep.subr.bf16.mxu0 0
        %1184 = vmatpush1.bf16.xpose.msra.mxu0 0
        %1185 = vmatprep.subr.bf16.mxu0 0
        %1186 = vmatpush1.bf16.xpose.msra.mxu0 %v1169
        %1187 = vmatprep.subr.bf16.mxu0 0
        %1188 = vmatpush2.bf16.xpose.msra.mxu0 0
        %1189 = vmatprep.subr.bf16.mxu0 0
        %1190 = vmatpush2.bf16.xpose.msra.mxu0 0
        %1191 = vmatprep.subr.bf16.mxu0 0
        %1192 = vmatpush2.bf16.xpose.msra.mxu0 0
        %1193 = vmatprep.subr.bf16.mxu0 0
        %1194 = vmatpush2.bf16.xpose.msra.mxu0 0
        %1195 = vmatprep.subr.bf16.mxu0 0
        %1196 = vmatpush2.bf16.xpose.msra.mxu0 0
        %1197 = vmatprep.subr.bf16.mxu0 0
        %1198 = vmatpush2.bf16.xpose.msra.mxu0 0
        %1199 = vmatprep.subr.bf16.mxu0 0
        %1200 = vmatpush2.bf16.xpose.msra.mxu0 0
        %1201 = vmatprep.subr.bf16.mxu0 0
        %1202 = vmatpush2.bf16.xpose.msra.mxu0 0
        %1203 = vmatprep.mubr.bf16.mxu0 0
        %1204 = vmatmul.mubr.bf16.gmra.mxu0 %v1166
        %v1205 = vpop.f32.mrf.mxu0
        %v1206 = vadd.f32 0.0, %v1205
        %v1207 = vpop.f32.mrf.mxu0
        %v1208 = vpop.f32.mrf.mxu0
        %v1209 = vpop.f32.mrf.mxu0
        %1210 = vdwg.mxu0
        %s1211 = scalar_lea.vmem [#allocation3], 8
        %v1212 = vld [vmem:[%s1211] sm:$0xff]
        %v1213 = vsel %vm902, %v1206, -inf
        %1214 = vmax.xlane.f32.xlu0 %v1213
        %v1215 = vpop.xlane.xlu0 %1214
        %v1216 = vmax.f32 %v1212, %v1215
        %v1217 = vsub.f32 %v1212, %v1216
        %v1218 = vmul.f32 %v1217, 1.442695
        %v1219 = vpow.pop %v1218
        %1221 = vset.pattern.permute.xlu0 0
        %1222 = vperm.xlu0 %1221, %v1216
        %v1223 = vpop.permute.xlu0 %1222
        %v1225 = vsub.f32 %v1206, %v1223
        %v1226 = vmul.f32 %v1225, 1.442695
        %v1227 = vpow.pop %v1226
        %s1228 = scalar_lea.vmem [#allocation4], 8
        %v1229 = vld [vmem:[%s1228] sm:$0xff]
        %v1230 = vmul.f32 %v1219, %v1229
        %v1231 = vsel %vm902, %v1227, 0.0
        %1232 = vadd.xlane.f32.xlu0 %v1231
        %v1233 = vpop.xlane.xlu0 %1232
        %v1234 = vadd.f32 %v1230, %v1233
        %1235 = vst.msk [vmem:[%s1228] sm:$0xff] %vm971, %v1234
        %s1236 = scalar_lea.vmem [#allocation5], 8
        %v1237 = vld [vmem:[%s1236] sm:$0xff]
        %1239 = vset.pattern.permute.xlu0 0
        %1240 = vperm.xlu0 %1239, %v1219
        %v1241 = vpop.permute.xlu0 %1240
        %v1243 = vmul.f32 %v1241, %v1237
        %v1244 = vpack.c.bf16 %v1227, %v1227
        %v1246 = vsel %vm902, %v1244, 0
        %v1249 = vsel %vm984, %v1162, 0
        %1251 = vmatprep.subr.bf16.mxu0 0
        %1252 = vmatpush1.bf16.msra.mxu0 0
        %1253 = vmatprep.subr.bf16.mxu0 0
        %1254 = vmatpush1.bf16.msra.mxu0 0
        %1255 = vmatprep.subr.bf16.mxu0 0
        %1256 = vmatpush1.bf16.msra.mxu0 0
        %1257 = vmatprep.subr.bf16.mxu0 0
        %1258 = vmatpush1.bf16.msra.mxu0 0
        %1259 = vmatprep.subr.bf16.mxu0 0
        %1260 = vmatpush1.bf16.msra.mxu0 0
        %1261 = vmatprep.subr.bf16.mxu0 0
        %1262 = vmatpush1.bf16.msra.mxu0 0
        %1263 = vmatprep.subr.bf16.mxu0 0
        %1264 = vmatpush1.bf16.msra.mxu0 0
        %1265 = vmatprep.subr.bf16.mxu0 0
        %1266 = vmatpush1.bf16.msra.mxu0 %v1249
        %1267 = vmatprep.subr.bf16.mxu0 0
        %1268 = vmatpush2.bf16.msra.mxu0 0
        %1269 = vmatprep.subr.bf16.mxu0 0
        %1270 = vmatpush2.bf16.msra.mxu0 0
        %1271 = vmatprep.subr.bf16.mxu0 0
        %1272 = vmatpush2.bf16.msra.mxu0 0
        %1273 = vmatprep.subr.bf16.mxu0 0
        %1274 = vmatpush2.bf16.msra.mxu0 0
        %1275 = vmatprep.subr.bf16.mxu0 0
        %1276 = vmatpush2.bf16.msra.mxu0 0
        %1277 = vmatprep.subr.bf16.mxu0 0
        %1278 = vmatpush2.bf16.msra.mxu0 0
        %1279 = vmatprep.subr.bf16.mxu0 0
        %1280 = vmatpush2.bf16.msra.mxu0 0
        %1281 = vmatprep.subr.bf16.mxu0 0
        %1282 = vmatpush2.bf16.msra.mxu0 0
        %1283 = vmatprep.mubr.bf16.mxu0 0
        %1284 = vmatmul.mubr.bf16.gmra.mxu0 %v1246
        %v1285 = vpop.f32.mrf.mxu0
        %v1286 = vadd.f32 0.0, %v1285
        %v1287 = vpop.f32.mrf.mxu0
        %v1288 = vpop.f32.mrf.mxu0
        %v1289 = vpop.f32.mrf.mxu0
        %1290 = vdwg.mxu0
        %v1291 = vadd.f32 %v1243, %v1286
        %1292 = vst.msk [vmem:[%s1236] sm:$0xff] %vm902, %v1291
        %1293 = vst.msk [vmem:[%s1211] sm:$0xff] %vm971, %v1216
        %s1294 = scalar_lea.vmem %s5, 32
        %v1295 = vld [vmem:[%s1294] sm:$0xf]
        %v1296 = vld [vmem:[%s1294 + $0x4] sm:$0xf]
        %v1297 = vld [vmem:[%s1294 + $0x8] sm:$0xf]
        %v1298 = vld [vmem:[%s1294 + $0xc] sm:$0xf]
        %s1299 = scalar_lea.vmem %s6, 2
        %v1300 = vld [vmem:[%s1299] sm:$0x1]
        %v1302 = vlaneseq
        %v1303 = vshrl.u32 %v1302, 7
        %v1304 = vsub.s32 0, %v1303
        %v1305 = vrot.slane %v1300, %v1304
        %v1311 = vunpack.c.l.b16 %v1295
        %v1312 = vunpack.c.l.b16 %v1296
        %v1313 = vunpack.c.l.b16 %v1297
        %v1314 = vunpack.c.l.b16 %v1298
        %v1315 = vpack.c.b16 %v1312, %v1311
        %v1316 = vpack.c.b16 %v1314, %v1313
        %1319 = vmatprep.subr.bf16.mxu0 0
        %1320 = vmatpush1.bf16.msra.mxu0 0
        %1321 = vmatprep.subr.bf16.mxu0 0
        %1322 = vmatpush1.bf16.msra.mxu0 0
        %1323 = vmatprep.subr.bf16.mxu0 0
        %1324 = vmatpush1.bf16.msra.mxu0 0
        %1325 = vmatprep.subr.bf16.mxu0 0
        %1326 = vmatpush1.bf16.msra.mxu0 0
        %1327 = vmatprep.subr.bf16.mxu0 0
        %1328 = vmatpush1.bf16.msra.mxu0 0
        %1329 = vmatprep.subr.bf16.mxu0 0
        %1330 = vmatpush1.bf16.msra.mxu0 0
        %1331 = vmatprep.subr.bf16.mxu0 0
        %1332 = vmatpush1.bf16.msra.mxu0 %v1316
        %1333 = vmatprep.subr.bf16.mxu0 0
        %1334 = vmatpush1.bf16.msra.mxu0 %v1315
        %1335 = vmatprep.subr.bf16.mxu0 0
        %1336 = vmatpush2.bf16.msra.mxu0 0
        %1337 = vmatprep.subr.bf16.mxu0 0
        %1338 = vmatpush2.bf16.msra.mxu0 0
        %1339 = vmatprep.subr.bf16.mxu0 0
        %1340 = vmatpush2.bf16.msra.mxu0 0
        %1341 = vmatprep.subr.bf16.mxu0 0
        %1342 = vmatpush2.bf16.msra.mxu0 0
        %1343 = vmatprep.subr.bf16.mxu0 0
        %1344 = vmatpush2.bf16.msra.mxu0 0
        %1345 = vmatprep.subr.bf16.mxu0 0
        %1346 = vmatpush2.bf16.msra.mxu0 0
        %1347 = vmatprep.subr.bf16.mxu0 0
        %1348 = vmatpush2.bf16.msra.mxu0 0
        %1349 = vmatprep.subr.bf16.mxu0 0
        %1350 = vmatpush2.bf16.msra.mxu0 0
        %1351 = vmatprep.mubr.bf16.mxu0 0
        %1352 = vmatmul.mubr.bf16.gmra.mxu0 %v791
        %v1353 = vpop.f32.mrf.mxu0
        %v1354 = vadd.f32 %v1305, %v1353
        %v1355 = vpop.f32.mrf.mxu0
        %v1356 = vpop.f32.mrf.mxu0
        %v1357 = vpop.f32.mrf.mxu0
        %1358 = vdwg.mxu0
        %v1359 = vpack.c.bf16 %v1354, %v1354
        %s1360 = scalar_lea.vmem %s7, 32
        %v1361 = vld [vmem:[%s1360] sm:$0xf]
        %v1362 = vld [vmem:[%s1360 + $0x4] sm:$0xf]
        %v1363 = vld [vmem:[%s1360 + $0x8] sm:$0xf]
        %v1364 = vld [vmem:[%s1360 + $0xc] sm:$0xf]
        %s1365 = scalar_lea.vmem %s8, 2
        %v1366 = vld [vmem:[%s1365] sm:$0x1]
        %v1368 = vlaneseq
        %v1369 = vshrl.u32 %v1368, 7
        %v1370 = vsub.s32 0, %v1369
        %v1371 = vrot.slane %v1366, %v1370
        %v1377 = vunpack.c.l.b16 %v1361
        %v1378 = vunpack.c.l.b16 %v1362
        %v1379 = vunpack.c.l.b16 %v1363
        %v1380 = vunpack.c.l.b16 %v1364
        %v1381 = vpack.c.b16 %v1378, %v1377
        %v1382 = vpack.c.b16 %v1380, %v1379
        %1385 = vmatprep.subr.bf16.mxu0 0
        %1386 = vmatpush1.bf16.msra.mxu0 0
        %1387 = vmatprep.subr.bf16.mxu0 0
        %1388 = vmatpush1.bf16.msra.mxu0 0
        %1389 = vmatprep.subr.bf16.mxu0 0
        %1390 = vmatpush1.bf16.msra.mxu0 0
        %1391 = vmatprep.subr.bf16.mxu0 0
        %1392 = vmatpush1.bf16.msra.mxu0 0
        %1393 = vmatprep.subr.bf16.mxu0 0
        %1394 = vmatpush1.bf16.msra.mxu0 0
        %1395 = vmatprep.subr.bf16.mxu0 0
        %1396 = vmatpush1.bf16.msra.mxu0 0
        %1397 = vmatprep.subr.bf16.mxu0 0
        %1398 = vmatpush1.bf16.msra.mxu0 %v1382
        %1399 = vmatprep.subr.bf16.mxu0 0
        %1400 = vmatpush1.bf16.msra.mxu0 %v1381
        %1401 = vmatprep.subr.bf16.mxu0 0
        %1402 = vmatpush2.bf16.msra.mxu0 0
        %1403 = vmatprep.subr.bf16.mxu0 0
        %1404 = vmatpush2.bf16.msra.mxu0 0
        %1405 = vmatprep.subr.bf16.mxu0 0
        %1406 = vmatpush2.bf16.msra.mxu0 0
        %1407 = vmatprep.subr.bf16.mxu0 0
        %1408 = vmatpush2.bf16.msra.mxu0 0
        %1409 = vmatprep.subr.bf16.mxu0 0
        %1410 = vmatpush2.bf16.msra.mxu0 0
        %1411 = vmatprep.subr.bf16.mxu0 0
        %1412 = vmatpush2.bf16.msra.mxu0 0
        %1413 = vmatprep.subr.bf16.mxu0 0
        %1414 = vmatpush2.bf16.msra.mxu0 0
        %1415 = vmatprep.subr.bf16.mxu0 0
        %1416 = vmatpush2.bf16.msra.mxu0 0
        %1417 = vmatprep.mubr.bf16.mxu0 0
        %1418 = vmatmul.mubr.bf16.gmra.mxu0 %v858
        %v1419 = vpop.f32.mrf.mxu0
        %v1420 = vadd.f32 %v1371, %v1419
        %v1421 = vpop.f32.mrf.mxu0
        %v1422 = vpop.f32.mrf.mxu0
        %v1423 = vpop.f32.mrf.mxu0
        %1424 = vdwg.mxu0
        %v1425 = vpack.c.bf16 %v1420, %v1420
        %s1426 = scalar_lea.vmem [#allocation2], 8
        %v1427 = vld [vmem:[%s1426] sm:$0xf]
        %v1429 = vsel %vm902, %v1427, 0
        %v1432 = vsel %vm902, %v1359, 0
        %1434 = vmatprep.subr.bf16.mxu0 0
        %1435 = vmatpush1.bf16.xpose.msra.mxu0 0
        %1436 = vmatprep.subr.bf16.mxu0 0
        %1437 = vmatpush1.bf16.xpose.msra.mxu0 0
        %1438 = vmatprep.subr.bf16.mxu0 0
        %1439 = vmatpush1.bf16.xpose.msra.mxu0 0
        %1440 = vmatprep.subr.bf16.mxu0 0
        %1441 = vmatpush1.bf16.xpose.msra.mxu0 0
        %1442 = vmatprep.subr.bf16.mxu0 0
        %1443 = vmatpush1.bf16.xpose.msra.mxu0 0
        %1444 = vmatprep.subr.bf16.mxu0 0
        %1445 = vmatpush1.bf16.xpose.msra.mxu0 0
        %1446 = vmatprep.subr.bf16.mxu0 0
        %1447 = vmatpush1.bf16.xpose.msra.mxu0 0
        %1448 = vmatprep.subr.bf16.mxu0 0
        %1449 = vmatpush1.bf16.xpose.msra.mxu0 %v1432
        %1450 = vmatprep.subr.bf16.mxu0 0
        %1451 = vmatpush2.bf16.xpose.msra.mxu0 0
        %1452 = vmatprep.subr.bf16.mxu0 0
        %1453 = vmatpush2.bf16.xpose.msra.mxu0 0
        %1454 = vmatprep.subr.bf16.mxu0 0
        %1455 = vmatpush2.bf16.xpose.msra.mxu0 0
        %1456 = vmatprep.subr.bf16.mxu0 0
        %1457 = vmatpush2.bf16.xpose.msra.mxu0 0
        %1458 = vmatprep.subr.bf16.mxu0 0
        %1459 = vmatpush2.bf16.xpose.msra.mxu0 0
        %1460 = vmatprep.subr.bf16.mxu0 0
        %1461 = vmatpush2.bf16.xpose.msra.mxu0 0
        %1462 = vmatprep.subr.bf16.mxu0 0
        %1463 = vmatpush2.bf16.xpose.msra.mxu0 0
        %1464 = vmatprep.subr.bf16.mxu0 0
        %1465 = vmatpush2.bf16.xpose.msra.mxu0 0
        %1466 = vmatprep.mubr.bf16.mxu0 0
        %1467 = vmatmul.mubr.bf16.gmra.mxu0 %v1429
        %v1468 = vpop.f32.mrf.mxu0
        %v1469 = vadd.f32 0.0, %v1468
        %v1470 = vpop.f32.mrf.mxu0
        %v1471 = vpop.f32.mrf.mxu0
        %v1472 = vpop.f32.mrf.mxu0
        %1473 = vdwg.mxu0
        %s1474 = scalar_lea.vmem [#allocation3], 16
        %v1475 = vld [vmem:[%s1474] sm:$0xff]
        %v1476 = vsel %vm902, %v1469, -inf
        %1477 = vmax.xlane.f32.xlu0 %v1476
        %v1478 = vpop.xlane.xlu0 %1477
        %v1479 = vmax.f32 %v1475, %v1478
        %v1480 = vsub.f32 %v1475, %v1479
        %v1481 = vmul.f32 %v1480, 1.442695
        %v1482 = vpow.pop %v1481
        %1484 = vset.pattern.permute.xlu0 0
        %1485 = vperm.xlu0 %1484, %v1479
        %v1486 = vpop.permute.xlu0 %1485
        %v1488 = vsub.f32 %v1469, %v1486
        %v1489 = vmul.f32 %v1488, 1.442695
        %v1490 = vpow.pop %v1489
        %s1491 = scalar_lea.vmem [#allocation4], 16
        %v1492 = vld [vmem:[%s1491] sm:$0xff]
        %v1493 = vmul.f32 %v1482, %v1492
        %v1494 = vsel %vm902, %v1490, 0.0
        %1495 = vadd.xlane.f32.xlu0 %v1494
        %v1496 = vpop.xlane.xlu0 %1495
        %v1497 = vadd.f32 %v1493, %v1496
        %1498 = vst.msk [vmem:[%s1491] sm:$0xff] %vm971, %v1497
        %s1499 = scalar_lea.vmem [#allocation5], 16
        %v1500 = vld [vmem:[%s1499] sm:$0xff]
        %1502 = vset.pattern.permute.xlu0 0
        %1503 = vperm.xlu0 %1502, %v1482
        %v1504 = vpop.permute.xlu0 %1503
        %v1506 = vmul.f32 %v1504, %v1500
        %v1507 = vpack.c.bf16 %v1490, %v1490
        %v1509 = vsel %vm902, %v1507, 0
        %v1512 = vsel %vm984, %v1425, 0
        %1514 = vmatprep.subr.bf16.mxu0 0
        %1515 = vmatpush1.bf16.msra.mxu0 0
        %1516 = vmatprep.subr.bf16.mxu0 0
        %1517 = vmatpush1.bf16.msra.mxu0 0
        %1518 = vmatprep.subr.bf16.mxu0 0
        %1519 = vmatpush1.bf16.msra.mxu0 0
        %1520 = vmatprep.subr.bf16.mxu0 0
        %1521 = vmatpush1.bf16.msra.mxu0 0
        %1522 = vmatprep.subr.bf16.mxu0 0
        %1523 = vmatpush1.bf16.msra.mxu0 0
        %1524 = vmatprep.subr.bf16.mxu0 0
        %1525 = vmatpush1.bf16.msra.mxu0 0
        %1526 = vmatprep.subr.bf16.mxu0 0
        %1527 = vmatpush1.bf16.msra.mxu0 0
        %1528 = vmatprep.subr.bf16.mxu0 0
        %1529 = vmatpush1.bf16.msra.mxu0 %v1512
        %1530 = vmatprep.subr.bf16.mxu0 0
        %1531 = vmatpush2.bf16.msra.mxu0 0
        %1532 = vmatprep.subr.bf16.mxu0 0
        %1533 = vmatpush2.bf16.msra.mxu0 0
        %1534 = vmatprep.subr.bf16.mxu0 0
        %1535 = vmatpush2.bf16.msra.mxu0 0
        %1536 = vmatprep.subr.bf16.mxu0 0
        %1537 = vmatpush2.bf16.msra.mxu0 0
        %1538 = vmatprep.subr.bf16.mxu0 0
        %1539 = vmatpush2.bf16.msra.mxu0 0
        %1540 = vmatprep.subr.bf16.mxu0 0
        %1541 = vmatpush2.bf16.msra.mxu0 0
        %1542 = vmatprep.subr.bf16.mxu0 0
        %1543 = vmatpush2.bf16.msra.mxu0 0
        %1544 = vmatprep.subr.bf16.mxu0 0
        %1545 = vmatpush2.bf16.msra.mxu0 0
        %1546 = vmatprep.mubr.bf16.mxu0 0
        %1547 = vmatmul.mubr.bf16.gmra.mxu0 %v1509
        %v1548 = vpop.f32.mrf.mxu0
        %v1549 = vadd.f32 0.0, %v1548
        %v1550 = vpop.f32.mrf.mxu0
        %v1551 = vpop.f32.mrf.mxu0
        %v1552 = vpop.f32.mrf.mxu0
        %1553 = vdwg.mxu0
        %v1554 = vadd.f32 %v1506, %v1549
        %1555 = vst.msk [vmem:[%s1499] sm:$0xff] %vm902, %v1554
        %1556 = vst.msk [vmem:[%s1474] sm:$0xff] %vm971, %v1479
        %s1557 = scalar_lea.vmem %s5, 48
        %v1558 = vld [vmem:[%s1557] sm:$0xf]
        %v1559 = vld [vmem:[%s1557 + $0x4] sm:$0xf]
        %v1560 = vld [vmem:[%s1557 + $0x8] sm:$0xf]
        %v1561 = vld [vmem:[%s1557 + $0xc] sm:$0xf]
        %s1562 = scalar_lea.vmem %s6, 3
        %v1563 = vld [vmem:[%s1562] sm:$0x1]
        %v1565 = vlaneseq
        %v1566 = vshrl.u32 %v1565, 7
        %v1567 = vsub.s32 0, %v1566
        %v1568 = vrot.slane %v1563, %v1567
        %v1574 = vunpack.c.l.b16 %v1558
        %v1575 = vunpack.c.l.b16 %v1559
        %v1576 = vunpack.c.l.b16 %v1560
        %v1577 = vunpack.c.l.b16 %v1561
        %v1578 = vpack.c.b16 %v1575, %v1574
        %v1579 = vpack.c.b16 %v1577, %v1576
        %1582 = vmatprep.subr.bf16.mxu0 0
        %1583 = vmatpush1.bf16.msra.mxu0 0
        %1584 = vmatprep.subr.bf16.mxu0 0
        %1585 = vmatpush1.bf16.msra.mxu0 0
        %1586 = vmatprep.subr.bf16.mxu0 0
        %1587 = vmatpush1.bf16.msra.mxu0 0
        %1588 = vmatprep.subr.bf16.mxu0 0
        %1589 = vmatpush1.bf16.msra.mxu0 0
        %1590 = vmatprep.subr.bf16.mxu0 0
        %1591 = vmatpush1.bf16.msra.mxu0 0
        %1592 = vmatprep.subr.bf16.mxu0 0
        %1593 = vmatpush1.bf16.msra.mxu0 0
        %1594 = vmatprep.subr.bf16.mxu0 0
        %1595 = vmatpush1.bf16.msra.mxu0 %v1579
        %1596 = vmatprep.subr.bf16.mxu0 0
        %1597 = vmatpush1.bf16.msra.mxu0 %v1578
        %1598 = vmatprep.subr.bf16.mxu0 0
        %1599 = vmatpush2.bf16.msra.mxu0 0
        %1600 = vmatprep.subr.bf16.mxu0 0
        %1601 = vmatpush2.bf16.msra.mxu0 0
        %1602 = vmatprep.subr.bf16.mxu0 0
        %1603 = vmatpush2.bf16.msra.mxu0 0
        %1604 = vmatprep.subr.bf16.mxu0 0
        %1605 = vmatpush2.bf16.msra.mxu0 0
        %1606 = vmatprep.subr.bf16.mxu0 0
        %1607 = vmatpush2.bf16.msra.mxu0 0
        %1608 = vmatprep.subr.bf16.mxu0 0
        %1609 = vmatpush2.bf16.msra.mxu0 0
        %1610 = vmatprep.subr.bf16.mxu0 0
        %1611 = vmatpush2.bf16.msra.mxu0 0
        %1612 = vmatprep.subr.bf16.mxu0 0
        %1613 = vmatpush2.bf16.msra.mxu0 0
        %1614 = vmatprep.mubr.bf16.mxu0 0
        %1615 = vmatmul.mubr.bf16.gmra.mxu0 %v791
        %v1616 = vpop.f32.mrf.mxu0
        %v1617 = vadd.f32 %v1568, %v1616
        %v1618 = vpop.f32.mrf.mxu0
        %v1619 = vpop.f32.mrf.mxu0
        %v1620 = vpop.f32.mrf.mxu0
        %1621 = vdwg.mxu0
        %v1622 = vpack.c.bf16 %v1617, %v1617
        %s1623 = scalar_lea.vmem %s7, 48
        %v1624 = vld [vmem:[%s1623] sm:$0xf]
        %v1625 = vld [vmem:[%s1623 + $0x4] sm:$0xf]
        %v1626 = vld [vmem:[%s1623 + $0x8] sm:$0xf]
        %v1627 = vld [vmem:[%s1623 + $0xc] sm:$0xf]
        %s1628 = scalar_lea.vmem %s8, 3
        %v1629 = vld [vmem:[%s1628] sm:$0x1]
        %v1631 = vlaneseq
        %v1632 = vshrl.u32 %v1631, 7
        %v1633 = vsub.s32 0, %v1632
        %v1634 = vrot.slane %v1629, %v1633
        %v1640 = vunpack.c.l.b16 %v1624
        %v1641 = vunpack.c.l.b16 %v1625
        %v1642 = vunpack.c.l.b16 %v1626
        %v1643 = vunpack.c.l.b16 %v1627
        %v1644 = vpack.c.b16 %v1641, %v1640
        %v1645 = vpack.c.b16 %v1643, %v1642
        %1648 = vmatprep.subr.bf16.mxu0 0
        %1649 = vmatpush1.bf16.msra.mxu0 0
        %1650 = vmatprep.subr.bf16.mxu0 0
        %1651 = vmatpush1.bf16.msra.mxu0 0
        %1652 = vmatprep.subr.bf16.mxu0 0
        %1653 = vmatpush1.bf16.msra.mxu0 0
        %1654 = vmatprep.subr.bf16.mxu0 0
        %1655 = vmatpush1.bf16.msra.mxu0 0
        %1656 = vmatprep.subr.bf16.mxu0 0
        %1657 = vmatpush1.bf16.msra.mxu0 0
        %1658 = vmatprep.subr.bf16.mxu0 0
        %1659 = vmatpush1.bf16.msra.mxu0 0
        %1660 = vmatprep.subr.bf16.mxu0 0
        %1661 = vmatpush1.bf16.msra.mxu0 %v1645
        %1662 = vmatprep.subr.bf16.mxu0 0
        %1663 = vmatpush1.bf16.msra.mxu0 %v1644
        %1664 = vmatprep.subr.bf16.mxu0 0
        %1665 = vmatpush2.bf16.msra.mxu0 0
        %1666 = vmatprep.subr.bf16.mxu0 0
        %1667 = vmatpush2.bf16.msra.mxu0 0
        %1668 = vmatprep.subr.bf16.mxu0 0
        %1669 = vmatpush2.bf16.msra.mxu0 0
        %1670 = vmatprep.subr.bf16.mxu0 0
        %1671 = vmatpush2.bf16.msra.mxu0 0
        %1672 = vmatprep.subr.bf16.mxu0 0
        %1673 = vmatpush2.bf16.msra.mxu0 0
        %1674 = vmatprep.subr.bf16.mxu0 0
        %1675 = vmatpush2.bf16.msra.mxu0 0
        %1676 = vmatprep.subr.bf16.mxu0 0
        %1677 = vmatpush2.bf16.msra.mxu0 0
        %1678 = vmatprep.subr.bf16.mxu0 0
        %1679 = vmatpush2.bf16.msra.mxu0 0
        %1680 = vmatprep.mubr.bf16.mxu0 0
        %1681 = vmatmul.mubr.bf16.gmra.mxu0 %v858
        %v1682 = vpop.f32.mrf.mxu0
        %v1683 = vadd.f32 %v1634, %v1682
        %v1684 = vpop.f32.mrf.mxu0
        %v1685 = vpop.f32.mrf.mxu0
        %v1686 = vpop.f32.mrf.mxu0
        %1687 = vdwg.mxu0
        %v1688 = vpack.c.bf16 %v1683, %v1683
        %s1689 = scalar_lea.vmem [#allocation2], 12
        %v1690 = vld [vmem:[%s1689] sm:$0xf]
        %v1692 = vsel %vm902, %v1690, 0
        %v1695 = vsel %vm902, %v1622, 0
        %1697 = vmatprep.subr.bf16.mxu0 0
        %1698 = vmatpush1.bf16.xpose.msra.mxu0 0
        %1699 = vmatprep.subr.bf16.mxu0 0
        %1700 = vmatpush1.bf16.xpose.msra.mxu0 0
        %1701 = vmatprep.subr.bf16.mxu0 0
        %1702 = vmatpush1.bf16.xpose.msra.mxu0 0
        %1703 = vmatprep.subr.bf16.mxu0 0
        %1704 = vmatpush1.bf16.xpose.msra.mxu0 0
        %1705 = vmatprep.subr.bf16.mxu0 0
        %1706 = vmatpush1.bf16.xpose.msra.mxu0 0
        %1707 = vmatprep.subr.bf16.mxu0 0
        %1708 = vmatpush1.bf16.xpose.msra.mxu0 0
        %1709 = vmatprep.subr.bf16.mxu0 0
        %1710 = vmatpush1.bf16.xpose.msra.mxu0 0
        %1711 = vmatprep.subr.bf16.mxu0 0
        %1712 = vmatpush1.bf16.xpose.msra.mxu0 %v1695
        %1713 = vmatprep.subr.bf16.mxu0 0
        %1714 = vmatpush2.bf16.xpose.msra.mxu0 0
        %1715 = vmatprep.subr.bf16.mxu0 0
        %1716 = vmatpush2.bf16.xpose.msra.mxu0 0
        %1717 = vmatprep.subr.bf16.mxu0 0
        %1718 = vmatpush2.bf16.xpose.msra.mxu0 0
        %1719 = vmatprep.subr.bf16.mxu0 0
        %1720 = vmatpush2.bf16.xpose.msra.mxu0 0
        %1721 = vmatprep.subr.bf16.mxu0 0
        %1722 = vmatpush2.bf16.xpose.msra.mxu0 0
        %1723 = vmatprep.subr.bf16.mxu0 0
        %1724 = vmatpush2.bf16.xpose.msra.mxu0 0
        %1725 = vmatprep.subr.bf16.mxu0 0
        %1726 = vmatpush2.bf16.xpose.msra.mxu0 0
        %1727 = vmatprep.subr.bf16.mxu0 0
        %1728 = vmatpush2.bf16.xpose.msra.mxu0 0
        %1729 = vmatprep.mubr.bf16.mxu0 0
        %1730 = vmatmul.mubr.bf16.gmra.mxu0 %v1692
        %v1731 = vpop.f32.mrf.mxu0
        %v1732 = vadd.f32 0.0, %v1731
        %v1733 = vpop.f32.mrf.mxu0
        %v1734 = vpop.f32.mrf.mxu0
        %v1735 = vpop.f32.mrf.mxu0
        %1736 = vdwg.mxu0
        %s1737 = scalar_lea.vmem [#allocation3], 24
        %v1738 = vld [vmem:[%s1737] sm:$0xff]
        %v1739 = vsel %vm902, %v1732, -inf
        %1740 = vmax.xlane.f32.xlu0 %v1739
        %v1741 = vpop.xlane.xlu0 %1740
        %v1742 = vmax.f32 %v1738, %v1741
        %v1743 = vsub.f32 %v1738, %v1742
        %v1744 = vmul.f32 %v1743, 1.442695
        %v1745 = vpow.pop %v1744
        %1747 = vset.pattern.permute.xlu0 0
        %1748 = vperm.xlu0 %1747, %v1742
        %v1749 = vpop.permute.xlu0 %1748
        %v1751 = vsub.f32 %v1732, %v1749
        %v1752 = vmul.f32 %v1751, 1.442695
        %v1753 = vpow.pop %v1752
        %s1754 = scalar_lea.vmem [#allocation4], 24
        %v1755 = vld [vmem:[%s1754] sm:$0xff]
        %v1756 = vmul.f32 %v1745, %v1755
        %v1757 = vsel %vm902, %v1753, 0.0
        %1758 = vadd.xlane.f32.xlu0 %v1757
        %v1759 = vpop.xlane.xlu0 %1758
        %v1760 = vadd.f32 %v1756, %v1759
        %1761 = vst.msk [vmem:[%s1754] sm:$0xff] %vm971, %v1760
        %s1762 = scalar_lea.vmem [#allocation5], 24
        %v1763 = vld [vmem:[%s1762] sm:$0xff]
        %1765 = vset.pattern.permute.xlu0 0
        %1766 = vperm.xlu0 %1765, %v1745
        %v1767 = vpop.permute.xlu0 %1766
        %v1769 = vmul.f32 %v1767, %v1763
        %v1770 = vpack.c.bf16 %v1753, %v1753
        %v1772 = vsel %vm902, %v1770, 0
        %v1775 = vsel %vm984, %v1688, 0
        %1777 = vmatprep.subr.bf16.mxu0 0
        %1778 = vmatpush1.bf16.msra.mxu0 0
        %1779 = vmatprep.subr.bf16.mxu0 0
        %1780 = vmatpush1.bf16.msra.mxu0 0
        %1781 = vmatprep.subr.bf16.mxu0 0
        %1782 = vmatpush1.bf16.msra.mxu0 0
        %1783 = vmatprep.subr.bf16.mxu0 0
        %1784 = vmatpush1.bf16.msra.mxu0 0
        %1785 = vmatprep.subr.bf16.mxu0 0
        %1786 = vmatpush1.bf16.msra.mxu0 0
        %1787 = vmatprep.subr.bf16.mxu0 0
        %1788 = vmatpush1.bf16.msra.mxu0 0
        %1789 = vmatprep.subr.bf16.mxu0 0
        %1790 = vmatpush1.bf16.msra.mxu0 0
        %1791 = vmatprep.subr.bf16.mxu0 0
        %1792 = vmatpush1.bf16.msra.mxu0 %v1775
        %1793 = vmatprep.subr.bf16.mxu0 0
        %1794 = vmatpush2.bf16.msra.mxu0 0
        %1795 = vmatprep.subr.bf16.mxu0 0
        %1796 = vmatpush2.bf16.msra.mxu0 0
        %1797 = vmatprep.subr.bf16.mxu0 0
        %1798 = vmatpush2.bf16.msra.mxu0 0
        %1799 = vmatprep.subr.bf16.mxu0 0
        %1800 = vmatpush2.bf16.msra.mxu0 0
        %1801 = vmatprep.subr.bf16.mxu0 0
        %1802 = vmatpush2.bf16.msra.mxu0 0
        %1803 = vmatprep.subr.bf16.mxu0 0
        %1804 = vmatpush2.bf16.msra.mxu0 0
        %1805 = vmatprep.subr.bf16.mxu0 0
        %1806 = vmatpush2.bf16.msra.mxu0 0
        %1807 = vmatprep.subr.bf16.mxu0 0
        %1808 = vmatpush2.bf16.msra.mxu0 0
        %1809 = vmatprep.mubr.bf16.mxu0 0
        %1810 = vmatmul.mubr.bf16.gmra.mxu0 %v1772
        %v1811 = vpop.f32.mrf.mxu0
        %v1812 = vadd.f32 0.0, %v1811
        %v1813 = vpop.f32.mrf.mxu0
        %v1814 = vpop.f32.mrf.mxu0
        %v1815 = vpop.f32.mrf.mxu0
        %1816 = vdwg.mxu0
        %v1817 = vadd.f32 %v1769, %v1812
        %1818 = vst.msk [vmem:[%s1762] sm:$0xff] %vm902, %v1817
        %1819 = vst.msk [vmem:[%s1737] sm:$0xff] %vm971, %v1742
        // Predicated region
        $region69: #{tpu_custom_call.1} parent=63 // pred_check
          %p1820 = pneg %p471
        $region70: #{tpu_custom_call.1} parent=63 // pred_check_branch
          %1822 = sbr.rel (%p1820) target = $region72
        $region71: #{tpu_custom_call.1} parent=63 // pred_region
          %v1823 = vld [vmem:[%s10] sm:$0x1]
          %v1824 = vld [vmem:[#allocation4] sm:$0xff]
          %v1825 = vrcp.pop %v1824
          %v1826 = vld [vmem:[#allocation5] sm:$0xff]
          %1828 = vset.pattern.permute.xlu0 0
          %1829 = vperm.xlu0 %1828, %v1825
          %v1830 = vpop.permute.xlu0 %1829
          %v1832 = vmul.f32 %v1826, %v1830
          %v1833 = vpack.c.bf16 %v1832, %v1832
          %v1834 = vld [vmem:[%s9] sm:$0xf]
          %v1836 = vsel %vm902, %v1833, 0
          %v1839 = vsel %vm984, %v1834, 0
          %1841 = vmatprep.subr.bf16.mxu0 0
          %1842 = vmatpush1.bf16.msra.mxu0 0
          %1843 = vmatprep.subr.bf16.mxu0 0
          %1844 = vmatpush1.bf16.msra.mxu0 0
          %1845 = vmatprep.subr.bf16.mxu0 0
          %1846 = vmatpush1.bf16.msra.mxu0 0
          %1847 = vmatprep.subr.bf16.mxu0 0
          %1848 = vmatpush1.bf16.msra.mxu0 0
          %1849 = vmatprep.subr.bf16.mxu0 0
          %1850 = vmatpush1.bf16.msra.mxu0 0
          %1851 = vmatprep.subr.bf16.mxu0 0
          %1852 = vmatpush1.bf16.msra.mxu0 0
          %1853 = vmatprep.subr.bf16.mxu0 0
          %1854 = vmatpush1.bf16.msra.mxu0 0
          %1855 = vmatprep.subr.bf16.mxu0 0
          %1856 = vmatpush1.bf16.msra.mxu0 %v1839
          %1857 = vmatprep.subr.bf16.mxu0 0
          %1858 = vmatpush2.bf16.msra.mxu0 0
          %1859 = vmatprep.subr.bf16.mxu0 0
          %1860 = vmatpush2.bf16.msra.mxu0 0
          %1861 = vmatprep.subr.bf16.mxu0 0
          %1862 = vmatpush2.bf16.msra.mxu0 0
          %1863 = vmatprep.subr.bf16.mxu0 0
          %1864 = vmatpush2.bf16.msra.mxu0 0
          %1865 = vmatprep.subr.bf16.mxu0 0
          %1866 = vmatpush2.bf16.msra.mxu0 0
          %1867 = vmatprep.subr.bf16.mxu0 0
          %1868 = vmatpush2.bf16.msra.mxu0 0
          %1869 = vmatprep.subr.bf16.mxu0 0
          %1870 = vmatpush2.bf16.msra.mxu0 0
          %1871 = vmatprep.subr.bf16.mxu0 0
          %1872 = vmatpush2.bf16.msra.mxu0 0
          %1873 = vmatprep.mubr.bf16.mxu0 0
          %1874 = vmatmul.mubr.bf16.gmra.mxu0 %v1836
          %v1875 = vpop.f32.mrf.mxu0
          %v1876 = vadd.f32 0.0, %v1875
          %v1877 = vpop.f32.mrf.mxu0
          %v1878 = vpop.f32.mrf.mxu0
          %v1879 = vpop.f32.mrf.mxu0
          %1880 = vdwg.mxu0
          %v1882 = vlaneseq
          %v1883 = vshrl.u32 %v1882, 7
          %v1884 = vsub.s32 0, %v1883
          %v1885 = vrot.slane %v1823, %v1884
          %v1887 = vadd.f32 %v1885, %v1876
          %v1888 = vld [vmem:[%s1228] sm:$0xff]
          %v1889 = vrcp.pop %v1888
          %v1890 = vld [vmem:[%s1236] sm:$0xff]
          %1892 = vset.pattern.permute.xlu0 0
          %1893 = vperm.xlu0 %1892, %v1889
          %v1894 = vpop.permute.xlu0 %1893
          %v1896 = vmul.f32 %v1890, %v1894
          %v1897 = vpack.c.bf16 %v1896, %v1896
          %s1898 = scalar_lea.vmem %s9, 4
          %v1899 = vld [vmem:[%s1898] sm:$0xf]
          %v1901 = vsel %vm902, %v1897, 0
          %v1904 = vsel %vm984, %v1899, 0
          %1906 = vmatprep.subr.bf16.mxu0 0
          %1907 = vmatpush1.bf16.msra.mxu0 0
          %1908 = vmatprep.subr.bf16.mxu0 0
          %1909 = vmatpush1.bf16.msra.mxu0 0
          %1910 = vmatprep.subr.bf16.mxu0 0
          %1911 = vmatpush1.bf16.msra.mxu0 0
          %1912 = vmatprep.subr.bf16.mxu0 0
          %1913 = vmatpush1.bf16.msra.mxu0 0
          %1914 = vmatprep.subr.bf16.mxu0 0
          %1915 = vmatpush1.bf16.msra.mxu0 0
          %1916 = vmatprep.subr.bf16.mxu0 0
          %1917 = vmatpush1.bf16.msra.mxu0 0
          %1918 = vmatprep.subr.bf16.mxu0 0
          %1919 = vmatpush1.bf16.msra.mxu0 0
          %1920 = vmatprep.subr.bf16.mxu0 0
          %1921 = vmatpush1.bf16.msra.mxu0 %v1904
          %1922 = vmatprep.subr.bf16.mxu0 0
          %1923 = vmatpush2.bf16.msra.mxu0 0
          %1924 = vmatprep.subr.bf16.mxu0 0
          %1925 = vmatpush2.bf16.msra.mxu0 0
          %1926 = vmatprep.subr.bf16.mxu0 0
          %1927 = vmatpush2.bf16.msra.mxu0 0
          %1928 = vmatprep.subr.bf16.mxu0 0
          %1929 = vmatpush2.bf16.msra.mxu0 0
          %1930 = vmatprep.subr.bf16.mxu0 0
          %1931 = vmatpush2.bf16.msra.mxu0 0
          %1932 = vmatprep.subr.bf16.mxu0 0
          %1933 = vmatpush2.bf16.msra.mxu0 0
          %1934 = vmatprep.subr.bf16.mxu0 0
          %1935 = vmatpush2.bf16.msra.mxu0 0
          %1936 = vmatprep.subr.bf16.mxu0 0
          %1937 = vmatpush2.bf16.msra.mxu0 0
          %1938 = vmatprep.mubr.bf16.mxu0 0
          %1939 = vmatmul.mubr.bf16.gmra.mxu0 %v1901
          %v1940 = vpop.f32.mrf.mxu0
          %v1941 = vadd.f32 0.0, %v1940
          %v1942 = vpop.f32.mrf.mxu0
          %v1943 = vpop.f32.mrf.mxu0
          %v1944 = vpop.f32.mrf.mxu0
          %1945 = vdwg.mxu0
          %v1946 = vadd.f32 %v1887, %v1941
          %v1947 = vld [vmem:[%s1491] sm:$0xff]
          %v1948 = vrcp.pop %v1947
          %v1949 = vld [vmem:[%s1499] sm:$0xff]
          %1951 = vset.pattern.permute.xlu0 0
          %1952 = vperm.xlu0 %1951, %v1948
          %v1953 = vpop.permute.xlu0 %1952
          %v1955 = vmul.f32 %v1949, %v1953
          %v1956 = vpack.c.bf16 %v1955, %v1955
          %s1957 = scalar_lea.vmem %s9, 8
          %v1958 = vld [vmem:[%s1957] sm:$0xf]
          %v1960 = vsel %vm902, %v1956, 0
          %v1963 = vsel %vm984, %v1958, 0
          %1965 = vmatprep.subr.bf16.mxu0 0
          %1966 = vmatpush1.bf16.msra.mxu0 0
          %1967 = vmatprep.subr.bf16.mxu0 0
          %1968 = vmatpush1.bf16.msra.mxu0 0
          %1969 = vmatprep.subr.bf16.mxu0 0
          %1970 = vmatpush1.bf16.msra.mxu0 0
          %1971 = vmatprep.subr.bf16.mxu0 0
          %1972 = vmatpush1.bf16.msra.mxu0 0
          %1973 = vmatprep.subr.bf16.mxu0 0
          %1974 = vmatpush1.bf16.msra.mxu0 0
          %1975 = vmatprep.subr.bf16.mxu0 0
          %1976 = vmatpush1.bf16.msra.mxu0 0
          %1977 = vmatprep.subr.bf16.mxu0 0
          %1978 = vmatpush1.bf16.msra.mxu0 0
          %1979 = vmatprep.subr.bf16.mxu0 0
          %1980 = vmatpush1.bf16.msra.mxu0 %v1963
          %1981 = vmatprep.subr.bf16.mxu0 0
          %1982 = vmatpush2.bf16.msra.mxu0 0
          %1983 = vmatprep.subr.bf16.mxu0 0
          %1984 = vmatpush2.bf16.msra.mxu0 0
          %1985 = vmatprep.subr.bf16.mxu0 0
          %1986 = vmatpush2.bf16.msra.mxu0 0
          %1987 = vmatprep.subr.bf16.mxu0 0
          %1988 = vmatpush2.bf16.msra.mxu0 0
          %1989 = vmatprep.subr.bf16.mxu0 0
          %1990 = vmatpush2.bf16.msra.mxu0 0
          %1991 = vmatprep.subr.bf16.mxu0 0
          %1992 = vmatpush2.bf16.msra.mxu0 0
          %1993 = vmatprep.subr.bf16.mxu0 0
          %1994 = vmatpush2.bf16.msra.mxu0 0
          %1995 = vmatprep.subr.bf16.mxu0 0
          %1996 = vmatpush2.bf16.msra.mxu0 0
          %1997 = vmatprep.mubr.bf16.mxu0 0
          %1998 = vmatmul.mubr.bf16.gmra.mxu0 %v1960
          %v1999 = vpop.f32.mrf.mxu0
          %v2000 = vadd.f32 0.0, %v1999
          %v2001 = vpop.f32.mrf.mxu0
          %v2002 = vpop.f32.mrf.mxu0
          %v2003 = vpop.f32.mrf.mxu0
          %2004 = vdwg.mxu0
          %v2005 = vadd.f32 %v1946, %v2000
          %v2006 = vld [vmem:[%s1754] sm:$0xff]
          %v2007 = vrcp.pop %v2006
          %v2008 = vld [vmem:[%s1762] sm:$0xff]
          %2010 = vset.pattern.permute.xlu0 0
          %2011 = vperm.xlu0 %2010, %v2007
          %v2012 = vpop.permute.xlu0 %2011
          %v2014 = vmul.f32 %v2008, %v2012
          %v2015 = vpack.c.bf16 %v2014, %v2014
          %s2016 = scalar_lea.vmem %s9, 12
          %v2017 = vld [vmem:[%s2016] sm:$0xf]
          %v2019 = vsel %vm902, %v2015, 0
          %v2022 = vsel %vm984, %v2017, 0
          %2024 = vmatprep.subr.bf16.mxu0 0
          %2025 = vmatpush1.bf16.msra.mxu0 0
          %2026 = vmatprep.subr.bf16.mxu0 0
          %2027 = vmatpush1.bf16.msra.mxu0 0
          %2028 = vmatprep.subr.bf16.mxu0 0
          %2029 = vmatpush1.bf16.msra.mxu0 0
          %2030 = vmatprep.subr.bf16.mxu0 0
          %2031 = vmatpush1.bf16.msra.mxu0 0
          %2032 = vmatprep.subr.bf16.mxu0 0
          %2033 = vmatpush1.bf16.msra.mxu0 0
          %2034 = vmatprep.subr.bf16.mxu0 0
          %2035 = vmatpush1.bf16.msra.mxu0 0
          %2036 = vmatprep.subr.bf16.mxu0 0
          %2037 = vmatpush1.bf16.msra.mxu0 0
          %2038 = vmatprep.subr.bf16.mxu0 0
          %2039 = vmatpush1.bf16.msra.mxu0 %v2022
          %2040 = vmatprep.subr.bf16.mxu0 0
          %2041 = vmatpush2.bf16.msra.mxu0 0
          %2042 = vmatprep.subr.bf16.mxu0 0
          %2043 = vmatpush2.bf16.msra.mxu0 0
          %2044 = vmatprep.subr.bf16.mxu0 0
          %2045 = vmatpush2.bf16.msra.mxu0 0
          %2046 = vmatprep.subr.bf16.mxu0 0
          %2047 = vmatpush2.bf16.msra.mxu0 0
          %2048 = vmatprep.subr.bf16.mxu0 0
          %2049 = vmatpush2.bf16.msra.mxu0 0
          %2050 = vmatprep.subr.bf16.mxu0 0
          %2051 = vmatpush2.bf16.msra.mxu0 0
          %2052 = vmatprep.subr.bf16.mxu0 0
          %2053 = vmatpush2.bf16.msra.mxu0 0
          %2054 = vmatprep.subr.bf16.mxu0 0
          %2055 = vmatpush2.bf16.msra.mxu0 0
          %2056 = vmatprep.mubr.bf16.mxu0 0
          %2057 = vmatmul.mubr.bf16.gmra.mxu0 %v2019
          %v2058 = vpop.f32.mrf.mxu0
          %v2059 = vadd.f32 0.0, %v2058
          %v2060 = vpop.f32.mrf.mxu0
          %v2061 = vpop.f32.mrf.mxu0
          %v2062 = vpop.f32.mrf.mxu0
          %2063 = vdwg.mxu0
          %v2064 = vadd.f32 %v2005, %v2059
          %2065 = vst.msk [vmem:[%s448] sm:$0xff] %vm789, %v2064
        $region72: #{tpu_custom_call.1} parent=63 // pred_fallthru
          _
        %s2066 = sand.u32 %s306, 1
        %s2067 = scalar_lea.sflag [#allocation7], %s2066
        %s2068 = sand.u32 %s306, 1
        %s2069 = smul.addr %s2068, 8
        %s2070 = scalar_lea.vmem [#allocation6], %s2069
        // Predicated region
        $region73: #{tpu_custom_call.1} parent=63 // pred_check
          %p2071 = pneg %p316
        $region74: #{tpu_custom_call.1} parent=63 // pred_check_branch
          %2073 = sbr.rel (%p2071) target = $region76
        $region75: #{tpu_custom_call.1} parent=63 // pred_region
          %s2075 = ssub.s32 128, 128
          %2076 = vsyncadd %s2067, %s2075
          %s2077 = sadd.s32 %s31, %s30
          %s2078 = smul.addr %s2077, 128
          %s2079 = scalar_lea.hbm %s11, %s2078
          %s2081 = sshll.u32 %s2070, 4
          %s2082 = int_to_ptr.vmem [resolvable:$true] %s2081
          %2084 = dma.vmem_to_hbm [thread:$0]  %s2082, 128, %s2079, %s2067
        $region76: #{tpu_custom_call.1} parent=63 // pred_fallthru
          _
      $region64: #{tpu_custom_call.1} parent=5 // pred_fallthru
        _
      %p2085 = scmp.le.s32.totalorder 2, %s20
      // Predicated region
      $region77: #{tpu_custom_call.1} parent=5 // pred_check
        %p2086 = pneg %p2085
      $region78: #{tpu_custom_call.1} parent=5 // pred_check_branch
        %2088 = sbr.rel (%p2086) target = $region80
      $region79: #{tpu_custom_call.1} parent=5 // pred_region
        %s2089 = ssub.s32 %s20, 2
        // Predicated region
        $region81: #{tpu_custom_call.1} parent=79 // pred_check
          %p2090 = pneg %p322
        $region82: #{tpu_custom_call.1} parent=79 // pred_check_branch
          %2092 = sbr.rel (%p2090) target = $region84
        $region83: #{tpu_custom_call.1} parent=79 // pred_region
          %s2093 = sand.u32 %s307, 1
          %s2094 = scalar_lea.sflag [#allocation7], %s2093
          %s2095 = sand.u32 %s307, 1
          %s2096 = smul.addr %s2095, 8
          %s2097 = scalar_lea.vmem [#allocation6], %s2096
          %2098 = dma.done %s2094, 128
        $region84: #{tpu_custom_call.1} parent=79 // pred_fallthru
          _
      $region80: #{tpu_custom_call.1} parent=5 // pred_fallthru
        _
    $region6: #{tpu_custom_call.1} parent=1 // loop_footer
      %s24 = sadd.s32 1, %s20
    $region7: #{tpu_custom_call.1} parent=1 // loop_footer_branch
      %19 = sbr.rel target = $region3
    $region8: #{tpu_custom_call.1} parent=1 // loop_exit
      _
    %2099 = vsyncpa [#allocation7], 1
    %s2100 = scalar_lea.sflag [#allocation7], 1
    %2101 = vsyncpa %s2100, 1

</llo_original>
